<compile_context>
chip_gen: v7x
topology: tpu7x:2x2x1
jax: 0.10.0
libtpu: 0.0.40
codegen_flags: <defaults>
</compile_context>

<pallas_src>
import functools

import jax
import jax.numpy as jnp
from jax.experimental import pallas as pl
from jax.experimental.pallas import tpu as pltpu


# ----------------------------------------------------------------------------
# Single fused kernel: 2-layer LSTM recurrence + concat + linear head.
# No grid: everything fits in VMEM; the recurrence is unrolled over T.
# ----------------------------------------------------------------------------
def _lstm_net_kernel(xf_ref, wih1_ref, whh1_ref, b1_ref, wih2_ref, whh2_ref,
                     b2_ref, fcst_ref, wh_ref, wf_ref, bout_ref, y_ref,
                     *, T, B, H):
    # Batched layer-1 input projection for every timestep in one MXU matmul.
    # xf_ref is time-major flattened: row block [t*B:(t+1)*B] is timestep t.
    xproj = jnp.dot(xf_ref[...], wih1_ref[...],
                    preferred_element_type=jnp.float32) + b1_ref[...]   # (T*B, 4H)

    whh1 = whh1_ref[...]
    wih2 = wih2_ref[...]
    whh2 = whh2_ref[...]
    b2 = b2_ref[...]

    def gates(pre):
        # One full-width sigmoid + one full-width tanh, slice afterwards.
        # PyTorch gate order: i, f, g, o.
        sig = jax.nn.sigmoid(pre)
        tnh = jnp.tanh(pre)
        i_g = sig[:, 0 * H:1 * H]
        f_g = sig[:, 1 * H:2 * H]
        g_g = tnh[:, 2 * H:3 * H]
        o_g = sig[:, 3 * H:4 * H]
        return i_g, f_g, g_g, o_g

    h1 = jnp.zeros((B, H), jnp.float32)
    c1 = jnp.zeros((B, H), jnp.float32)
    h2 = jnp.zeros((B, H), jnp.float32)
    c2 = jnp.zeros((B, H), jnp.float32)

    for t in range(T):                                   # static unroll, T small
        # --- layer 1 cell ---
        pre1 = xproj[t * B:(t + 1) * B, :] + jnp.dot(
            h1, whh1, preferred_element_type=jnp.float32)
        i1, f1, g1, o1 = gates(pre1)
        c1 = f1 * c1 + i1 * g1
        h1 = o1 * jnp.tanh(c1)

        # --- layer 2 cell ---
        pre2 = (jnp.dot(h1, wih2, preferred_element_type=jnp.float32)
                + jnp.dot(h2, whh2, preferred_element_type=jnp.float32)
                + b2)
        i2, f2, g2, o2 = gates(pre2)
        c2 = f2 * c2 + i2 * g2
        h2 = o2 * jnp.tanh(c2)

    # Fused head: y = h_last @ W_h + fcst_flat @ W_f + b_out
    y_ref[...] = (jnp.dot(h2, wh_ref[...], preferred_element_type=jnp.float32)
                  + jnp.dot(fcst_ref[...], wf_ref[...],
                            preferred_element_type=jnp.float32)
                  + bout_ref[...])


# ----------------------------------------------------------------------------
# Wrapper: layout plumbing (time-major, batch padded to a full sublane) + call.
# ----------------------------------------------------------------------------
def lstm_network_forward(observed_data, available_forecasts, params,
                         hidden_units, out_dim, out_timesteps):
    # observed_data: (B, T, D_hist)   available_forecasts: (B, T_f, D_f)
    B, T, D = observed_data.shape
    H = hidden_units
    O = out_dim * out_timesteps
    B_pad = max(8, ((B + 7) // 8) * 8)           # full f32 sublane

    # Time-major, batch-padded, flattened over (T, B_pad) -> (T*B_pad, D).
    x_tbd = jnp.transpose(observed_data, (1, 0, 2))                    # (T, B, D)
    x_tbd = jnp.pad(x_tbd, ((0, 0), (0, B_pad - B), (0, 0)))
    xf = x_tbd.reshape(T * B_pad, D)

    fcst = available_forecasts.reshape(B, -1)                          # (B, F)
    fcst = jnp.pad(fcst, ((0, B_pad - B), (0, 0)))

    wih1_t, whh1_t, b1, wih2_t, whh2_t, b2 = params["lstm"]
    wh_out = params["w_out_t"][:H, :]            # rows for h_last     (H, O)
    wf_out = params["w_out_t"][H:, :]            # rows for fcst_flat  (F, O)
    b_out = params["b_out"]                      # (1, O)

    vmem = pl.BlockSpec(memory_space=pltpu.MemorySpace.VMEM)
    y = pl.pallas_call(
        functools.partial(_lstm_net_kernel, T=T, B=B_pad, H=H),
        out_shape=jax.ShapeDtypeStruct((B_pad, O), jnp.float32),
        in_specs=[vmem] * 11,
        out_specs=vmem,
    )(xf, wih1_t, whh1_t, b1, wih2_t, whh2_t, b2, fcst, wh_out, wf_out, b_out)

    return y[:B].reshape(B, out_timesteps, out_dim)


# ----------------------------------------------------------------------------
# Deterministic parameter init (shapes follow nn.LSTM / nn.Linear)
# ----------------------------------------------------------------------------
def init_params(key, hist_dim_in, avail_fcst_dim_in, avail_fcst_tsteps,
                hidden_units, out_dim, out_timesteps):
    H = hidden_units
    concat_dim = H + avail_fcst_dim_in * avail_fcst_tsteps
    out_features = out_dim * out_timesteps
    ks = jax.random.split(key, 10)
    k = 1.0 / jnp.sqrt(H)
    u = lambda kk, shape: jax.random.uniform(kk, shape, jnp.float32, -k, k)

    # nn.LSTM layer 0: W_ih (4H, D), W_hh (4H, H), b_ih (4H,), b_hh (4H,)
    wih1 = u(ks[0], (4 * H, hist_dim_in))
    whh1 = u(ks[1], (4 * H, H))
    b1 = (u(ks[2], (4 * H,)) + u(ks[3], (4 * H,))).reshape(1, 4 * H)
    # nn.LSTM layer 1: W_ih (4H, H), W_hh (4H, H)
    wih2 = u(ks[4], (4 * H, H))
    whh2 = u(ks[5], (4 * H, H))
    b2 = (u(ks[6], (4 * H,)) + u(ks[7], (4 * H,))).reshape(1, 4 * H)
    # nn.Linear(concat_dim, out_dim*out_timesteps)
    kl = 1.0 / jnp.sqrt(concat_dim)
    w_out = jax.random.uniform(ks[8], (out_features, concat_dim), jnp.float32, -kl, kl)
    b_out = jax.random.uniform(ks[9], (out_features,), jnp.float32, -kl, kl)

    return {
        "lstm": (wih1.T, whh1.T, b1, wih2.T, whh2.T, b2),
        "w_out_t": w_out.T,                              # (concat_dim, O)
        "b_out": b_out.reshape(1, out_features),
    }


# ----------------------------------------------------------------------------
# Pure-JAX reference (mirrors PyTorch LSTMNetwork.forward) for validation.
# ----------------------------------------------------------------------------
def _reference_forward(observed_data, available_forecasts, params,
                       hidden_units, out_dim, out_timesteps):
    H = hidden_units
    hp = jax.lax.Precision.HIGHEST
    wih1_t, whh1_t, b1, wih2_t, whh2_t, b2 = params["lstm"]
    B, T, _ = observed_data.shape
    h1 = jnp.zeros((B, H), jnp.float32)
    c1 = jnp.zeros((B, H), jnp.float32)
    h2 = jnp.zeros((B, H), jnp.float32)
    c2 = jnp.zeros((B, H), jnp.float32)

    def gates(pre):
        return (jax.nn.sigmoid(pre[:, :H]), jax.nn.sigmoid(pre[:, H:2 * H]),
                jnp.tanh(pre[:, 2 * H:3 * H]), jax.nn.sigmoid(pre[:, 3 * H:]))

    for t in range(T):
        x_t = observed_data[:, t, :]
        pre1 = (jnp.dot(x_t, wih1_t, precision=hp)
                + jnp.dot(h1, whh1_t, precision=hp) + b1)
        i, f, g, o = gates(pre1)
        c1 = f * c1 + i * g
        h1 = o * jnp.tanh(c1)
        pre2 = (jnp.dot(h1, wih2_t, precision=hp)
                + jnp.dot(h2, whh2_t, precision=hp) + b2)
        i, f, g, o = gates(pre2)
        c2 = f * c2 + i * g
        h2 = o * jnp.tanh(c2)

    z = jnp.concatenate([h2, available_forecasts.reshape(B, -1)], axis=-1)
    y = jnp.dot(z, params["w_out_t"], precision=hp) + params["b_out"]
    return y.reshape(-1, out_timesteps, out_dim)


if __name__ == "__main__":
    # Module config: in_dim=(hist_dim_in, avail_fcst_dim_in),
    #                in_timesteps=(hist_tsteps, avail_fcst_tsteps)
    B = 2
    hist_dim_in, avail_fcst_dim_in = 4, 3
    hist_tsteps, avail_fcst_tsteps = 8, 5
    hidden_units = 32
    out_dim, out_timesteps = 2, 4

    key = jax.random.PRNGKey(0)
    kx, kf, kp = jax.random.split(key, 3)

    observed_data = jax.random.normal(kx, (B, hist_tsteps, hist_dim_in), jnp.float32)
    available_forecasts = jax.random.normal(
        kf, (B, avail_fcst_tsteps, avail_fcst_dim_in), jnp.float32)

    params = init_params(kp, hist_dim_in, avail_fcst_dim_in, avail_fcst_tsteps,
                         hidden_units, out_dim, out_timesteps)

    fwd = jax.jit(functools.partial(
        lstm_network_forward,
        hidden_units=hidden_units, out_dim=out_dim, out_timesteps=out_timesteps))
    out = jax.block_until_ready(fwd(observed_data, available_forecasts, params))

    assert out.shape == (B, out_timesteps, out_dim), out.shape
    assert jnp.all(jnp.isfinite(out))

    ref = _reference_forward(observed_data, available_forecasts, params,
                             hidden_units, out_dim, out_timesteps)
    assert jnp.allclose(out, ref, rtol=2e-3, atol=2e-3), (
        float(jnp.max(jnp.abs(out - ref))))

    print("KERNEL_OK")
</pallas_src>

<mosaic_0001>
module attributes {stable_mosaic.version = 11 : i64} {
  func.func @_lstm_net_kernel(%arg0: memref<64x4xf32, #tpu.memory_space<vmem>>, %arg1: memref<4x128xf32, #tpu.memory_space<vmem>>, %arg2: memref<32x128xf32, #tpu.memory_space<vmem>>, %arg3: memref<1x128xf32, #tpu.memory_space<vmem>>, %arg4: memref<32x128xf32, #tpu.memory_space<vmem>>, %arg5: memref<32x128xf32, #tpu.memory_space<vmem>>, %arg6: memref<1x128xf32, #tpu.memory_space<vmem>>, %arg7: memref<8x15xf32, #tpu.memory_space<vmem>>, %arg8: memref<32x8xf32, #tpu.memory_space<vmem>>, %arg9: memref<15x8xf32, #tpu.memory_space<vmem>>, %arg10: memref<1x8xf32, #tpu.memory_space<vmem>>, %arg11: memref<8x8xf32, #tpu.memory_space<vmem>>) attributes {dimension_semantics = [], scalar_prefetch = 0 : i64, scratch_operands = 0 : i64, tpu.core_type = #tpu.core_type<tc>} {
    %c0 = arith.constant 0 : index
    %c0_0 = arith.constant 0 : index
    %0 = vector.load %arg0[%c0, %c0_0] : memref<64x4xf32, #tpu.memory_space<vmem>>, vector<64x4xf32>
    %c0_1 = arith.constant 0 : index
    %c0_2 = arith.constant 0 : index
    %1 = vector.load %arg1[%c0_1, %c0_2] : memref<4x128xf32, #tpu.memory_space<vmem>>, vector<4x128xf32>
    %cst = arith.constant dense<0.000000e+00> : vector<64x128xf32>
    %2 = tpu.matmul %0, %1, %cst {dimension_numbers = #tpu.dot_dimension_numbers<[1], [0], [0], [1], [0, 0, 1, 1], [], []>} : vector<64x4xf32>, vector<4x128xf32>, vector<64x128xf32> -> vector<64x128xf32>
    %c0_3 = arith.constant 0 : index
    %c0_4 = arith.constant 0 : index
    %3 = vector.load %arg3[%c0_3, %c0_4] : memref<1x128xf32, #tpu.memory_space<vmem>>, vector<1x128xf32>
    %4 = vector.broadcast %3 : vector<1x128xf32> to vector<64x128xf32>
    %5 = arith.addf %2, %4 : vector<64x128xf32>
    %c0_5 = arith.constant 0 : index
    %c0_6 = arith.constant 0 : index
    %6 = vector.load %arg2[%c0_5, %c0_6] : memref<32x128xf32, #tpu.memory_space<vmem>>, vector<32x128xf32>
    %c0_7 = arith.constant 0 : index
    %c0_8 = arith.constant 0 : index
    %7 = vector.load %arg4[%c0_7, %c0_8] : memref<32x128xf32, #tpu.memory_space<vmem>>, vector<32x128xf32>
    %c0_9 = arith.constant 0 : index
    %c0_10 = arith.constant 0 : index
    %8 = vector.load %arg5[%c0_9, %c0_10] : memref<32x128xf32, #tpu.memory_space<vmem>>, vector<32x128xf32>
    %c0_11 = arith.constant 0 : index
    %c0_12 = arith.constant 0 : index
    %9 = vector.load %arg6[%c0_11, %c0_12] : memref<1x128xf32, #tpu.memory_space<vmem>>, vector<1x128xf32>
    %cst_13 = arith.constant 0.000000e+00 : f32
    %10 = vector.broadcast %cst_13 : f32 to vector<8x32xf32>
    %cst_14 = arith.constant 0.000000e+00 : f32
    %11 = vector.broadcast %cst_14 : f32 to vector<8x32xf32>
    %cst_15 = arith.constant 0.000000e+00 : f32
    %12 = vector.broadcast %cst_15 : f32 to vector<8x32xf32>
    %cst_16 = arith.constant 0.000000e+00 : f32
    %13 = vector.broadcast %cst_16 : f32 to vector<8x32xf32>
    %14 = vector.extract_strided_slice %5 {offsets = [0, 0], sizes = [8, 128], strides = [1, 1]} : vector<64x128xf32> to vector<8x128xf32>
    %cst_17 = arith.constant dense<0.000000e+00> : vector<8x128xf32>
    %15 = tpu.matmul %10, %6, %cst_17 {dimension_numbers = #tpu.dot_dimension_numbers<[1], [0], [0], [1], [0, 0, 1, 1], [], []>} : vector<8x32xf32>, vector<32x128xf32>, vector<8x128xf32> -> vector<8x128xf32>
    %16 = arith.addf %14, %15 : vector<8x128xf32>
    %17 = arith.negf %16 : vector<8x128xf32>
    %18 = math.exp %17 : vector<8x128xf32>
    %cst_18 = arith.constant 1.000000e+00 : f32
    %19 = vector.broadcast %cst_18 : f32 to vector<8x128xf32>
    %20 = arith.addf %19, %18 : vector<8x128xf32>
    %21 = arith.divf %19, %20 : vector<8x128xf32>
    %22 = math.tanh %16 : vector<8x128xf32>
    %23 = vector.extract_strided_slice %21 {offsets = [0, 0], sizes = [8, 32], strides = [1, 1]} : vector<8x128xf32> to vector<8x32xf32>
    %24 = vector.extract_strided_slice %21 {offsets = [0, 32], sizes = [8, 32], strides = [1, 1]} : vector<8x128xf32> to vector<8x32xf32>
    %25 = vector.extract_strided_slice %22 {offsets = [0, 64], sizes = [8, 32], strides = [1, 1]} : vector<8x128xf32> to vector<8x32xf32>
    %26 = vector.extract_strided_slice %21 {offsets = [0, 96], sizes = [8, 32], strides = [1, 1]} : vector<8x128xf32> to vector<8x32xf32>
    %27 = arith.mulf %24, %11 : vector<8x32xf32>
    %28 = arith.mulf %23, %25 : vector<8x32xf32>
    %29 = arith.addf %27, %28 : vector<8x32xf32>
    %30 = math.tanh %29 : vector<8x32xf32>
    %31 = arith.mulf %26, %30 : vector<8x32xf32>
    %cst_19 = arith.constant dense<0.000000e+00> : vector<8x128xf32>
    %32 = tpu.matmul %31, %7, %cst_19 {dimension_numbers = #tpu.dot_dimension_numbers<[1], [0], [0], [1], [0, 0, 1, 1], [], []>} : vector<8x32xf32>, vector<32x128xf32>, vector<8x128xf32> -> vector<8x128xf32>
    %cst_20 = arith.constant dense<0.000000e+00> : vector<8x128xf32>
    %33 = tpu.matmul %12, %8, %cst_20 {dimension_numbers = #tpu.dot_dimension_numbers<[1], [0], [0], [1], [0, 0, 1, 1], [], []>} : vector<8x32xf32>, vector<32x128xf32>, vector<8x128xf32> -> vector<8x128xf32>
    %34 = arith.addf %32, %33 : vector<8x128xf32>
    %35 = vector.broadcast %9 : vector<1x128xf32> to vector<8x128xf32>
    %36 = arith.addf %34, %35 : vector<8x128xf32>
    %37 = arith.negf %36 : vector<8x128xf32>
    %38 = math.exp %37 : vector<8x128xf32>
    %cst_21 = arith.constant 1.000000e+00 : f32
    %39 = vector.broadcast %cst_21 : f32 to vector<8x128xf32>
    %40 = arith.addf %39, %38 : vector<8x128xf32>
    %41 = arith.divf %39, %40 : vector<8x128xf32>
    %42 = math.tanh %36 : vector<8x128xf32>
    %43 = vector.extract_strided_slice %41 {offsets = [0, 0], sizes = [8, 32], strides = [1, 1]} : vector<8x128xf32> to vector<8x32xf32>
    %44 = vector.extract_strided_slice %41 {offsets = [0, 32], sizes = [8, 32], strides = [1, 1]} : vector<8x128xf32> to vector<8x32xf32>
    %45 = vector.extract_strided_slice %42 {offsets = [0, 64], sizes = [8, 32], strides = [1, 1]} : vector<8x128xf32> to vector<8x32xf32>
    %46 = vector.extract_strided_slice %41 {offsets = [0, 96], sizes = [8, 32], strides = [1, 1]} : vector<8x128xf32> to vector<8x32xf32>
    %47 = arith.mulf %44, %13 : vector<8x32xf32>
    %48 = arith.mulf %43, %45 : vector<8x32xf32>
    %49 = arith.addf %47, %48 : vector<8x32xf32>
    %50 = math.tanh %49 : vector<8x32xf32>
    %51 = arith.mulf %46, %50 : vector<8x32xf32>
    %52 = vector.extract_strided_slice %5 {offsets = [8, 0], sizes = [8, 128], strides = [1, 1]} : vector<64x128xf32> to vector<8x128xf32>
    %cst_22 = arith.constant dense<0.000000e+00> : vector<8x128xf32>
    %53 = tpu.matmul %31, %6, %cst_22 {dimension_numbers = #tpu.dot_dimension_numbers<[1], [0], [0], [1], [0, 0, 1, 1], [], []>} : vector<8x32xf32>, vector<32x128xf32>, vector<8x128xf32> -> vector<8x128xf32>
    %54 = arith.addf %52, %53 : vector<8x128xf32>
    %55 = arith.negf %54 : vector<8x128xf32>
    %56 = math.exp %55 : vector<8x128xf32>
    %cst_23 = arith.constant 1.000000e+00 : f32
    %57 = vector.broadcast %cst_23 : f32 to vector<8x128xf32>
    %58 = arith.addf %57, %56 : vector<8x128xf32>
    %59 = arith.divf %57, %58 : vector<8x128xf32>
    %60 = math.tanh %54 : vector<8x128xf32>
    %61 = vector.extract_strided_slice %59 {offsets = [0, 0], sizes = [8, 32], strides = [1, 1]} : vector<8x128xf32> to vector<8x32xf32>
    %62 = vector.extract_strided_slice %59 {offsets = [0, 32], sizes = [8, 32], strides = [1, 1]} : vector<8x128xf32> to vector<8x32xf32>
    %63 = vector.extract_strided_slice %60 {offsets = [0, 64], sizes = [8, 32], strides = [1, 1]} : vector<8x128xf32> to vector<8x32xf32>
    %64 = vector.extract_strided_slice %59 {offsets = [0, 96], sizes = [8, 32], strides = [1, 1]} : vector<8x128xf32> to vector<8x32xf32>
    %65 = arith.mulf %62, %29 : vector<8x32xf32>
    %66 = arith.mulf %61, %63 : vector<8x32xf32>
    %67 = arith.addf %65, %66 : vector<8x32xf32>
    %68 = math.tanh %67 : vector<8x32xf32>
    %69 = arith.mulf %64, %68 : vector<8x32xf32>
    %cst_24 = arith.constant dense<0.000000e+00> : vector<8x128xf32>
    %70 = tpu.matmul %69, %7, %cst_24 {dimension_numbers = #tpu.dot_dimension_numbers<[1], [0], [0], [1], [0, 0, 1, 1], [], []>} : vector<8x32xf32>, vector<32x128xf32>, vector<8x128xf32> -> vector<8x128xf32>
    %cst_25 = arith.constant dense<0.000000e+00> : vector<8x128xf32>
    %71 = tpu.matmul %51, %8, %cst_25 {dimension_numbers = #tpu.dot_dimension_numbers<[1], [0], [0], [1], [0, 0, 1, 1], [], []>} : vector<8x32xf32>, vector<32x128xf32>, vector<8x128xf32> -> vector<8x128xf32>
    %72 = arith.addf %70, %71 : vector<8x128xf32>
    %73 = vector.broadcast %9 : vector<1x128xf32> to vector<8x128xf32>
    %74 = arith.addf %72, %73 : vector<8x128xf32>
    %75 = arith.negf %74 : vector<8x128xf32>
    %76 = math.exp %75 : vector<8x128xf32>
    %cst_26 = arith.constant 1.000000e+00 : f32
    %77 = vector.broadcast %cst_26 : f32 to vector<8x128xf32>
    %78 = arith.addf %77, %76 : vector<8x128xf32>
    %79 = arith.divf %77, %78 : vector<8x128xf32>
    %80 = math.tanh %74 : vector<8x128xf32>
    %81 = vector.extract_strided_slice %79 {offsets = [0, 0], sizes = [8, 32], strides = [1, 1]} : vector<8x128xf32> to vector<8x32xf32>
    %82 = vector.extract_strided_slice %79 {offsets = [0, 32], sizes = [8, 32], strides = [1, 1]} : vector<8x128xf32> to vector<8x32xf32>
    %83 = vector.extract_strided_slice %80 {offsets = [0, 64], sizes = [8, 32], strides = [1, 1]} : vector<8x128xf32> to vector<8x32xf32>
    %84 = vector.extract_strided_slice %79 {offsets = [0, 96], sizes = [8, 32], strides = [1, 1]} : vector<8x128xf32> to vector<8x32xf32>
    %85 = arith.mulf %82, %49 : vector<8x32xf32>
    %86 = arith.mulf %81, %83 : vector<8x32xf32>
    %87 = arith.addf %85, %86 : vector<8x32xf32>
    %88 = math.tanh %87 : vector<8x32xf32>
    %89 = arith.mulf %84, %88 : vector<8x32xf32>
    %90 = vector.extract_strided_slice %5 {offsets = [16, 0], sizes = [8, 128], strides = [1, 1]} : vector<64x128xf32> to vector<8x128xf32>
    %cst_27 = arith.constant dense<0.000000e+00> : vector<8x128xf32>
    %91 = tpu.matmul %69, %6, %cst_27 {dimension_numbers = #tpu.dot_dimension_numbers<[1], [0], [0], [1], [0, 0, 1, 1], [], []>} : vector<8x32xf32>, vector<32x128xf32>, vector<8x128xf32> -> vector<8x128xf32>
    %92 = arith.addf %90, %91 : vector<8x128xf32>
    %93 = arith.negf %92 : vector<8x128xf32>
    %94 = math.exp %93 : vector<8x128xf32>
    %cst_28 = arith.constant 1.000000e+00 : f32
    %95 = vector.broadcast %cst_28 : f32 to vector<8x128xf32>
    %96 = arith.addf %95, %94 : vector<8x128xf32>
    %97 = arith.divf %95, %96 : vector<8x128xf32>
    %98 = math.tanh %92 : vector<8x128xf32>
    %99 = vector.extract_strided_slice %97 {offsets = [0, 0], sizes = [8, 32], strides = [1, 1]} : vector<8x128xf32> to vector<8x32xf32>
    %100 = vector.extract_strided_slice %97 {offsets = [0, 32], sizes = [8, 32], strides = [1, 1]} : vector<8x128xf32> to vector<8x32xf32>
    %101 = vector.extract_strided_slice %98 {offsets = [0, 64], sizes = [8, 32], strides = [1, 1]} : vector<8x128xf32> to vector<8x32xf32>
    %102 = vector.extract_strided_slice %97 {offsets = [0, 96], sizes = [8, 32], strides = [1, 1]} : vector<8x128xf32> to vector<8x32xf32>
    %103 = arith.mulf %100, %67 : vector<8x32xf32>
    %104 = arith.mulf %99, %101 : vector<8x32xf32>
    %105 = arith.addf %103, %104 : vector<8x32xf32>
    %106 = math.tanh %105 : vector<8x32xf32>
    %107 = arith.mulf %102, %106 : vector<8x32xf32>
    %cst_29 = arith.constant dense<0.000000e+00> : vector<8x128xf32>
    %108 = tpu.matmul %107, %7, %cst_29 {dimension_numbers = #tpu.dot_dimension_numbers<[1], [0], [0], [1], [0, 0, 1, 1], [], []>} : vector<8x32xf32>, vector<32x128xf32>, vector<8x128xf32> -> vector<8x128xf32>
    %cst_30 = arith.constant dense<0.000000e+00> : vector<8x128xf32>
    %109 = tpu.matmul %89, %8, %cst_30 {dimension_numbers = #tpu.dot_dimension_numbers<[1], [0], [0], [1], [0, 0, 1, 1], [], []>} : vector<8x32xf32>, vector<32x128xf32>, vector<8x128xf32> -> vector<8x128xf32>
    %110 = arith.addf %108, %109 : vector<8x128xf32>
    %111 = vector.broadcast %9 : vector<1x128xf32> to vector<8x128xf32>
    %112 = arith.addf %110, %111 : vector<8x128xf32>
    %113 = arith.negf %112 : vector<8x128xf32>
    %114 = math.exp %113 : vector<8x128xf32>
    %cst_31 = arith.constant 1.000000e+00 : f32
    %115 = vector.broadcast %cst_31 : f32 to vector<8x128xf32>
    %116 = arith.addf %115, %114 : vector<8x128xf32>
    %117 = arith.divf %115, %116 : vector<8x128xf32>
    %118 = math.tanh %112 : vector<8x128xf32>
    %119 = vector.extract_strided_slice %117 {offsets = [0, 0], sizes = [8, 32], strides = [1, 1]} : vector<8x128xf32> to vector<8x32xf32>
    %120 = vector.extract_strided_slice %117 {offsets = [0, 32], sizes = [8, 32], strides = [1, 1]} : vector<8x128xf32> to vector<8x32xf32>
    %121 = vector.extract_strided_slice %118 {offsets = [0, 64], sizes = [8, 32], strides = [1, 1]} : vector<8x128xf32> to vector<8x32xf32>
    %122 = vector.extract_strided_slice %117 {offsets = [0, 96], sizes = [8, 32], strides = [1, 1]} : vector<8x128xf32> to vector<8x32xf32>
    %123 = arith.mulf %120, %87 : vector<8x32xf32>
    %124 = arith.mulf %119, %121 : vector<8x32xf32>
    %125 = arith.addf %123, %124 : vector<8x32xf32>
    %126 = math.tanh %125 : vector<8x32xf32>
    %127 = arith.mulf %122, %126 : vector<8x32xf32>
    %128 = vector.extract_strided_slice %5 {offsets = [24, 0], sizes = [8, 128], strides = [1, 1]} : vector<64x128xf32> to vector<8x128xf32>
    %cst_32 = arith.constant dense<0.000000e+00> : vector<8x128xf32>
    %129 = tpu.matmul %107, %6, %cst_32 {dimension_numbers = #tpu.dot_dimension_numbers<[1], [0], [0], [1], [0, 0, 1, 1], [], []>} : vector<8x32xf32>, vector<32x128xf32>, vector<8x128xf32> -> vector<8x128xf32>
    %130 = arith.addf %128, %129 : vector<8x128xf32>
    %131 = arith.negf %130 : vector<8x128xf32>
    %132 = math.exp %131 : vector<8x128xf32>
    %cst_33 = arith.constant 1.000000e+00 : f32
    %133 = vector.broadcast %cst_33 : f32 to vector<8x128xf32>
    %134 = arith.addf %133, %132 : vector<8x128xf32>
    %135 = arith.divf %133, %134 : vector<8x128xf32>
    %136 = math.tanh %130 : vector<8x128xf32>
    %137 = vector.extract_strided_slice %135 {offsets = [0, 0], sizes = [8, 32], strides = [1, 1]} : vector<8x128xf32> to vector<8x32xf32>
    %138 = vector.extract_strided_slice %135 {offsets = [0, 32], sizes = [8, 32], strides = [1, 1]} : vector<8x128xf32> to vector<8x32xf32>
    %139 = vector.extract_strided_slice %136 {offsets = [0, 64], sizes = [8, 32], strides = [1, 1]} : vector<8x128xf32> to vector<8x32xf32>
    %140 = vector.extract_strided_slice %135 {offsets = [0, 96], sizes = [8, 32], strides = [1, 1]} : vector<8x128xf32> to vector<8x32xf32>
    %141 = arith.mulf %138, %105 : vector<8x32xf32>
    %142 = arith.mulf %137, %139 : vector<8x32xf32>
    %143 = arith.addf %141, %142 : vector<8x32xf32>
    %144 = math.tanh %143 : vector<8x32xf32>
    %145 = arith.mulf %140, %144 : vector<8x32xf32>
    %cst_34 = arith.constant dense<0.000000e+00> : vector<8x128xf32>
    %146 = tpu.matmul %145, %7, %cst_34 {dimension_numbers = #tpu.dot_dimension_numbers<[1], [0], [0], [1], [0, 0, 1, 1], [], []>} : vector<8x32xf32>, vector<32x128xf32>, vector<8x128xf32> -> vector<8x128xf32>
    %cst_35 = arith.constant dense<0.000000e+00> : vector<8x128xf32>
    %147 = tpu.matmul %127, %8, %cst_35 {dimension_numbers = #tpu.dot_dimension_numbers<[1], [0], [0], [1], [0, 0, 1, 1], [], []>} : vector<8x32xf32>, vector<32x128xf32>, vector<8x128xf32> -> vector<8x128xf32>
    %148 = arith.addf %146, %147 : vector<8x128xf32>
    %149 = vector.broadcast %9 : vector<1x128xf32> to vector<8x128xf32>
    %150 = arith.addf %148, %149 : vector<8x128xf32>
    %151 = arith.negf %150 : vector<8x128xf32>
    %152 = math.exp %151 : vector<8x128xf32>
    %cst_36 = arith.constant 1.000000e+00 : f32
    %153 = vector.broadcast %cst_36 : f32 to vector<8x128xf32>
    %154 = arith.addf %153, %152 : vector<8x128xf32>
    %155 = arith.divf %153, %154 : vector<8x128xf32>
    %156 = math.tanh %150 : vector<8x128xf32>
    %157 = vector.extract_strided_slice %155 {offsets = [0, 0], sizes = [8, 32], strides = [1, 1]} : vector<8x128xf32> to vector<8x32xf32>
    %158 = vector.extract_strided_slice %155 {offsets = [0, 32], sizes = [8, 32], strides = [1, 1]} : vector<8x128xf32> to vector<8x32xf32>
    %159 = vector.extract_strided_slice %156 {offsets = [0, 64], sizes = [8, 32], strides = [1, 1]} : vector<8x128xf32> to vector<8x32xf32>
    %160 = vector.extract_strided_slice %155 {offsets = [0, 96], sizes = [8, 32], strides = [1, 1]} : vector<8x128xf32> to vector<8x32xf32>
    %161 = arith.mulf %158, %125 : vector<8x32xf32>
    %162 = arith.mulf %157, %159 : vector<8x32xf32>
    %163 = arith.addf %161, %162 : vector<8x32xf32>
    %164 = math.tanh %163 : vector<8x32xf32>
    %165 = arith.mulf %160, %164 : vector<8x32xf32>
    %166 = vector.extract_strided_slice %5 {offsets = [32, 0], sizes = [8, 128], strides = [1, 1]} : vector<64x128xf32> to vector<8x128xf32>
    %cst_37 = arith.constant dense<0.000000e+00> : vector<8x128xf32>
    %167 = tpu.matmul %145, %6, %cst_37 {dimension_numbers = #tpu.dot_dimension_numbers<[1], [0], [0], [1], [0, 0, 1, 1], [], []>} : vector<8x32xf32>, vector<32x128xf32>, vector<8x128xf32> -> vector<8x128xf32>
    %168 = arith.addf %166, %167 : vector<8x128xf32>
    %169 = arith.negf %168 : vector<8x128xf32>
    %170 = math.exp %169 : vector<8x128xf32>
    %cst_38 = arith.constant 1.000000e+00 : f32
    %171 = vector.broadcast %cst_38 : f32 to vector<8x128xf32>
    %172 = arith.addf %171, %170 : vector<8x128xf32>
    %173 = arith.divf %171, %172 : vector<8x128xf32>
    %174 = math.tanh %168 : vector<8x128xf32>
    %175 = vector.extract_strided_slice %173 {offsets = [0, 0], sizes = [8, 32], strides = [1, 1]} : vector<8x128xf32> to vector<8x32xf32>
    %176 = vector.extract_strided_slice %173 {offsets = [0, 32], sizes = [8, 32], strides = [1, 1]} : vector<8x128xf32> to vector<8x32xf32>
    %177 = vector.extract_strided_slice %174 {offsets = [0, 64], sizes = [8, 32], strides = [1, 1]} : vector<8x128xf32> to vector<8x32xf32>
    %178 = vector.extract_strided_slice %173 {offsets = [0, 96], sizes = [8, 32], strides = [1, 1]} : vector<8x128xf32> to vector<8x32xf32>
    %179 = arith.mulf %176, %143 : vector<8x32xf32>
    %180 = arith.mulf %175, %177 : vector<8x32xf32>
    %181 = arith.addf %179, %180 : vector<8x32xf32>
    %182 = math.tanh %181 : vector<8x32xf32>
    %183 = arith.mulf %178, %182 : vector<8x32xf32>
    %cst_39 = arith.constant dense<0.000000e+00> : vector<8x128xf32>
    %184 = tpu.matmul %183, %7, %cst_39 {dimension_numbers = #tpu.dot_dimension_numbers<[1], [0], [0], [1], [0, 0, 1, 1], [], []>} : vector<8x32xf32>, vector<32x128xf32>, vector<8x128xf32> -> vector<8x128xf32>
    %cst_40 = arith.constant dense<0.000000e+00> : vector<8x128xf32>
    %185 = tpu.matmul %165, %8, %cst_40 {dimension_numbers = #tpu.dot_dimension_numbers<[1], [0], [0], [1], [0, 0, 1, 1], [], []>} : vector<8x32xf32>, vector<32x128xf32>, vector<8x128xf32> -> vector<8x128xf32>
    %186 = arith.addf %184, %185 : vector<8x128xf32>
    %187 = vector.broadcast %9 : vector<1x128xf32> to vector<8x128xf32>
    %188 = arith.addf %186, %187 : vector<8x128xf32>
    %189 = arith.negf %188 : vector<8x128xf32>
    %190 = math.exp %189 : vector<8x128xf32>
    %cst_41 = arith.constant 1.000000e+00 : f32
    %191 = vector.broadcast %cst_41 : f32 to vector<8x128xf32>
    %192 = arith.addf %191, %190 : vector<8x128xf32>
    %193 = arith.divf %191, %192 : vector<8x128xf32>
    %194 = math.tanh %188 : vector<8x128xf32>
    %195 = vector.extract_strided_slice %193 {offsets = [0, 0], sizes = [8, 32], strides = [1, 1]} : vector<8x128xf32> to vector<8x32xf32>
    %196 = vector.extract_strided_slice %193 {offsets = [0, 32], sizes = [8, 32], strides = [1, 1]} : vector<8x128xf32> to vector<8x32xf32>
    %197 = vector.extract_strided_slice %194 {offsets = [0, 64], sizes = [8, 32], strides = [1, 1]} : vector<8x128xf32> to vector<8x32xf32>
    %198 = vector.extract_strided_slice %193 {offsets = [0, 96], sizes = [8, 32], strides = [1, 1]} : vector<8x128xf32> to vector<8x32xf32>
    %199 = arith.mulf %196, %163 : vector<8x32xf32>
    %200 = arith.mulf %195, %197 : vector<8x32xf32>
    %201 = arith.addf %199, %200 : vector<8x32xf32>
    %202 = math.tanh %201 : vector<8x32xf32>
    %203 = arith.mulf %198, %202 : vector<8x32xf32>
    %204 = vector.extract_strided_slice %5 {offsets = [40, 0], sizes = [8, 128], strides = [1, 1]} : vector<64x128xf32> to vector<8x128xf32>
    %cst_42 = arith.constant dense<0.000000e+00> : vector<8x128xf32>
    %205 = tpu.matmul %183, %6, %cst_42 {dimension_numbers = #tpu.dot_dimension_numbers<[1], [0], [0], [1], [0, 0, 1, 1], [], []>} : vector<8x32xf32>, vector<32x128xf32>, vector<8x128xf32> -> vector<8x128xf32>
    %206 = arith.addf %204, %205 : vector<8x128xf32>
    %207 = arith.negf %206 : vector<8x128xf32>
    %208 = math.exp %207 : vector<8x128xf32>
    %cst_43 = arith.constant 1.000000e+00 : f32
    %209 = vector.broadcast %cst_43 : f32 to vector<8x128xf32>
    %210 = arith.addf %209, %208 : vector<8x128xf32>
    %211 = arith.divf %209, %210 : vector<8x128xf32>
    %212 = math.tanh %206 : vector<8x128xf32>
    %213 = vector.extract_strided_slice %211 {offsets = [0, 0], sizes = [8, 32], strides = [1, 1]} : vector<8x128xf32> to vector<8x32xf32>
    %214 = vector.extract_strided_slice %211 {offsets = [0, 32], sizes = [8, 32], strides = [1, 1]} : vector<8x128xf32> to vector<8x32xf32>
    %215 = vector.extract_strided_slice %212 {offsets = [0, 64], sizes = [8, 32], strides = [1, 1]} : vector<8x128xf32> to vector<8x32xf32>
    %216 = vector.extract_strided_slice %211 {offsets = [0, 96], sizes = [8, 32], strides = [1, 1]} : vector<8x128xf32> to vector<8x32xf32>
    %217 = arith.mulf %214, %181 : vector<8x32xf32>
    %218 = arith.mulf %213, %215 : vector<8x32xf32>
    %219 = arith.addf %217, %218 : vector<8x32xf32>
    %220 = math.tanh %219 : vector<8x32xf32>
    %221 = arith.mulf %216, %220 : vector<8x32xf32>
    %cst_44 = arith.constant dense<0.000000e+00> : vector<8x128xf32>
    %222 = tpu.matmul %221, %7, %cst_44 {dimension_numbers = #tpu.dot_dimension_numbers<[1], [0], [0], [1], [0, 0, 1, 1], [], []>} : vector<8x32xf32>, vector<32x128xf32>, vector<8x128xf32> -> vector<8x128xf32>
    %cst_45 = arith.constant dense<0.000000e+00> : vector<8x128xf32>
    %223 = tpu.matmul %203, %8, %cst_45 {dimension_numbers = #tpu.dot_dimension_numbers<[1], [0], [0], [1], [0, 0, 1, 1], [], []>} : vector<8x32xf32>, vector<32x128xf32>, vector<8x128xf32> -> vector<8x128xf32>
    %224 = arith.addf %222, %223 : vector<8x128xf32>
    %225 = vector.broadcast %9 : vector<1x128xf32> to vector<8x128xf32>
    %226 = arith.addf %224, %225 : vector<8x128xf32>
    %227 = arith.negf %226 : vector<8x128xf32>
    %228 = math.exp %227 : vector<8x128xf32>
    %cst_46 = arith.constant 1.000000e+00 : f32
    %229 = vector.broadcast %cst_46 : f32 to vector<8x128xf32>
    %230 = arith.addf %229, %228 : vector<8x128xf32>
    %231 = arith.divf %229, %230 : vector<8x128xf32>
    %232 = math.tanh %226 : vector<8x128xf32>
    %233 = vector.extract_strided_slice %231 {offsets = [0, 0], sizes = [8, 32], strides = [1, 1]} : vector<8x128xf32> to vector<8x32xf32>
    %234 = vector.extract_strided_slice %231 {offsets = [0, 32], sizes = [8, 32], strides = [1, 1]} : vector<8x128xf32> to vector<8x32xf32>
    %235 = vector.extract_strided_slice %232 {offsets = [0, 64], sizes = [8, 32], strides = [1, 1]} : vector<8x128xf32> to vector<8x32xf32>
    %236 = vector.extract_strided_slice %231 {offsets = [0, 96], sizes = [8, 32], strides = [1, 1]} : vector<8x128xf32> to vector<8x32xf32>
    %237 = arith.mulf %234, %201 : vector<8x32xf32>
    %238 = arith.mulf %233, %235 : vector<8x32xf32>
    %239 = arith.addf %237, %238 : vector<8x32xf32>
    %240 = math.tanh %239 : vector<8x32xf32>
    %241 = arith.mulf %236, %240 : vector<8x32xf32>
    %242 = vector.extract_strided_slice %5 {offsets = [48, 0], sizes = [8, 128], strides = [1, 1]} : vector<64x128xf32> to vector<8x128xf32>
    %cst_47 = arith.constant dense<0.000000e+00> : vector<8x128xf32>
    %243 = tpu.matmul %221, %6, %cst_47 {dimension_numbers = #tpu.dot_dimension_numbers<[1], [0], [0], [1], [0, 0, 1, 1], [], []>} : vector<8x32xf32>, vector<32x128xf32>, vector<8x128xf32> -> vector<8x128xf32>
    %244 = arith.addf %242, %243 : vector<8x128xf32>
    %245 = arith.negf %244 : vector<8x128xf32>
    %246 = math.exp %245 : vector<8x128xf32>
    %cst_48 = arith.constant 1.000000e+00 : f32
    %247 = vector.broadcast %cst_48 : f32 to vector<8x128xf32>
    %248 = arith.addf %247, %246 : vector<8x128xf32>
    %249 = arith.divf %247, %248 : vector<8x128xf32>
    %250 = math.tanh %244 : vector<8x128xf32>
    %251 = vector.extract_strided_slice %249 {offsets = [0, 0], sizes = [8, 32], strides = [1, 1]} : vector<8x128xf32> to vector<8x32xf32>
    %252 = vector.extract_strided_slice %249 {offsets = [0, 32], sizes = [8, 32], strides = [1, 1]} : vector<8x128xf32> to vector<8x32xf32>
    %253 = vector.extract_strided_slice %250 {offsets = [0, 64], sizes = [8, 32], strides = [1, 1]} : vector<8x128xf32> to vector<8x32xf32>
    %254 = vector.extract_strided_slice %249 {offsets = [0, 96], sizes = [8, 32], strides = [1, 1]} : vector<8x128xf32> to vector<8x32xf32>
    %255 = arith.mulf %252, %219 : vector<8x32xf32>
    %256 = arith.mulf %251, %253 : vector<8x32xf32>
    %257 = arith.addf %255, %256 : vector<8x32xf32>
    %258 = math.tanh %257 : vector<8x32xf32>
    %259 = arith.mulf %254, %258 : vector<8x32xf32>
    %cst_49 = arith.constant dense<0.000000e+00> : vector<8x128xf32>
    %260 = tpu.matmul %259, %7, %cst_49 {dimension_numbers = #tpu.dot_dimension_numbers<[1], [0], [0], [1], [0, 0, 1, 1], [], []>} : vector<8x32xf32>, vector<32x128xf32>, vector<8x128xf32> -> vector<8x128xf32>
    %cst_50 = arith.constant dense<0.000000e+00> : vector<8x128xf32>
    %261 = tpu.matmul %241, %8, %cst_50 {dimension_numbers = #tpu.dot_dimension_numbers<[1], [0], [0], [1], [0, 0, 1, 1], [], []>} : vector<8x32xf32>, vector<32x128xf32>, vector<8x128xf32> -> vector<8x128xf32>
    %262 = arith.addf %260, %261 : vector<8x128xf32>
    %263 = vector.broadcast %9 : vector<1x128xf32> to vector<8x128xf32>
    %264 = arith.addf %262, %263 : vector<8x128xf32>
    %265 = arith.negf %264 : vector<8x128xf32>
    %266 = math.exp %265 : vector<8x128xf32>
    %cst_51 = arith.constant 1.000000e+00 : f32
    %267 = vector.broadcast %cst_51 : f32 to vector<8x128xf32>
    %268 = arith.addf %267, %266 : vector<8x128xf32>
    %269 = arith.divf %267, %268 : vector<8x128xf32>
    %270 = math.tanh %264 : vector<8x128xf32>
    %271 = vector.extract_strided_slice %269 {offsets = [0, 0], sizes = [8, 32], strides = [1, 1]} : vector<8x128xf32> to vector<8x32xf32>
    %272 = vector.extract_strided_slice %269 {offsets = [0, 32], sizes = [8, 32], strides = [1, 1]} : vector<8x128xf32> to vector<8x32xf32>
    %273 = vector.extract_strided_slice %270 {offsets = [0, 64], sizes = [8, 32], strides = [1, 1]} : vector<8x128xf32> to vector<8x32xf32>
    %274 = vector.extract_strided_slice %269 {offsets = [0, 96], sizes = [8, 32], strides = [1, 1]} : vector<8x128xf32> to vector<8x32xf32>
    %275 = arith.mulf %272, %239 : vector<8x32xf32>
    %276 = arith.mulf %271, %273 : vector<8x32xf32>
    %277 = arith.addf %275, %276 : vector<8x32xf32>
    %278 = math.tanh %277 : vector<8x32xf32>
    %279 = arith.mulf %274, %278 : vector<8x32xf32>
    %280 = vector.extract_strided_slice %5 {offsets = [56, 0], sizes = [8, 128], strides = [1, 1]} : vector<64x128xf32> to vector<8x128xf32>
    %cst_52 = arith.constant dense<0.000000e+00> : vector<8x128xf32>
    %281 = tpu.matmul %259, %6, %cst_52 {dimension_numbers = #tpu.dot_dimension_numbers<[1], [0], [0], [1], [0, 0, 1, 1], [], []>} : vector<8x32xf32>, vector<32x128xf32>, vector<8x128xf32> -> vector<8x128xf32>
    %282 = arith.addf %280, %281 : vector<8x128xf32>
    %283 = arith.negf %282 : vector<8x128xf32>
    %284 = math.exp %283 : vector<8x128xf32>
    %cst_53 = arith.constant 1.000000e+00 : f32
    %285 = vector.broadcast %cst_53 : f32 to vector<8x128xf32>
    %286 = arith.addf %285, %284 : vector<8x128xf32>
    %287 = arith.divf %285, %286 : vector<8x128xf32>
    %288 = math.tanh %282 : vector<8x128xf32>
    %289 = vector.extract_strided_slice %287 {offsets = [0, 0], sizes = [8, 32], strides = [1, 1]} : vector<8x128xf32> to vector<8x32xf32>
    %290 = vector.extract_strided_slice %287 {offsets = [0, 32], sizes = [8, 32], strides = [1, 1]} : vector<8x128xf32> to vector<8x32xf32>
    %291 = vector.extract_strided_slice %288 {offsets = [0, 64], sizes = [8, 32], strides = [1, 1]} : vector<8x128xf32> to vector<8x32xf32>
    %292 = vector.extract_strided_slice %287 {offsets = [0, 96], sizes = [8, 32], strides = [1, 1]} : vector<8x128xf32> to vector<8x32xf32>
    %293 = arith.mulf %290, %257 : vector<8x32xf32>
    %294 = arith.mulf %289, %291 : vector<8x32xf32>
    %295 = arith.addf %293, %294 : vector<8x32xf32>
    %296 = math.tanh %295 : vector<8x32xf32>
    %297 = arith.mulf %292, %296 : vector<8x32xf32>
    %cst_54 = arith.constant dense<0.000000e+00> : vector<8x128xf32>
    %298 = tpu.matmul %297, %7, %cst_54 {dimension_numbers = #tpu.dot_dimension_numbers<[1], [0], [0], [1], [0, 0, 1, 1], [], []>} : vector<8x32xf32>, vector<32x128xf32>, vector<8x128xf32> -> vector<8x128xf32>
    %cst_55 = arith.constant dense<0.000000e+00> : vector<8x128xf32>
    %299 = tpu.matmul %279, %8, %cst_55 {dimension_numbers = #tpu.dot_dimension_numbers<[1], [0], [0], [1], [0, 0, 1, 1], [], []>} : vector<8x32xf32>, vector<32x128xf32>, vector<8x128xf32> -> vector<8x128xf32>
    %300 = arith.addf %298, %299 : vector<8x128xf32>
    %301 = vector.broadcast %9 : vector<1x128xf32> to vector<8x128xf32>
    %302 = arith.addf %300, %301 : vector<8x128xf32>
    %303 = arith.negf %302 : vector<8x128xf32>
    %304 = math.exp %303 : vector<8x128xf32>
    %cst_56 = arith.constant 1.000000e+00 : f32
    %305 = vector.broadcast %cst_56 : f32 to vector<8x128xf32>
    %306 = arith.addf %305, %304 : vector<8x128xf32>
    %307 = arith.divf %305, %306 : vector<8x128xf32>
    %308 = math.tanh %302 : vector<8x128xf32>
    %309 = vector.extract_strided_slice %307 {offsets = [0, 0], sizes = [8, 32], strides = [1, 1]} : vector<8x128xf32> to vector<8x32xf32>
    %310 = vector.extract_strided_slice %307 {offsets = [0, 32], sizes = [8, 32], strides = [1, 1]} : vector<8x128xf32> to vector<8x32xf32>
    %311 = vector.extract_strided_slice %308 {offsets = [0, 64], sizes = [8, 32], strides = [1, 1]} : vector<8x128xf32> to vector<8x32xf32>
    %312 = vector.extract_strided_slice %307 {offsets = [0, 96], sizes = [8, 32], strides = [1, 1]} : vector<8x128xf32> to vector<8x32xf32>
    %313 = arith.mulf %310, %277 : vector<8x32xf32>
    %314 = arith.mulf %309, %311 : vector<8x32xf32>
    %315 = arith.addf %313, %314 : vector<8x32xf32>
    %316 = math.tanh %315 : vector<8x32xf32>
    %317 = arith.mulf %312, %316 : vector<8x32xf32>
    %c0_57 = arith.constant 0 : index
    %c0_58 = arith.constant 0 : index
    %318 = vector.load %arg8[%c0_57, %c0_58] : memref<32x8xf32, #tpu.memory_space<vmem>>, vector<32x8xf32>
    %cst_59 = arith.constant dense<0.000000e+00> : vector<8x8xf32>
    %319 = tpu.matmul %317, %318, %cst_59 {dimension_numbers = #tpu.dot_dimension_numbers<[1], [0], [0], [1], [0, 0, 1, 1], [], []>} : vector<8x32xf32>, vector<32x8xf32>, vector<8x8xf32> -> vector<8x8xf32>
    %c0_60 = arith.constant 0 : index
    %c0_61 = arith.constant 0 : index
    %320 = vector.load %arg7[%c0_60, %c0_61] : memref<8x15xf32, #tpu.memory_space<vmem>>, vector<8x15xf32>
    %c0_62 = arith.constant 0 : index
    %c0_63 = arith.constant 0 : index
    %321 = vector.load %arg9[%c0_62, %c0_63] : memref<15x8xf32, #tpu.memory_space<vmem>>, vector<15x8xf32>
    %cst_64 = arith.constant dense<0.000000e+00> : vector<8x8xf32>
    %322 = tpu.matmul %320, %321, %cst_64 {dimension_numbers = #tpu.dot_dimension_numbers<[1], [0], [0], [1], [0, 0, 1, 1], [], []>} : vector<8x15xf32>, vector<15x8xf32>, vector<8x8xf32> -> vector<8x8xf32>
    %323 = arith.addf %319, %322 : vector<8x8xf32>
    %c0_65 = arith.constant 0 : index
    %c0_66 = arith.constant 0 : index
    %324 = vector.load %arg10[%c0_65, %c0_66] : memref<1x8xf32, #tpu.memory_space<vmem>>, vector<1x8xf32>
    %325 = vector.broadcast %324 : vector<1x8xf32> to vector<8x8xf32>
    %326 = arith.addf %323, %325 : vector<8x8xf32>
    %c0_67 = arith.constant 0 : index
    %c0_68 = arith.constant 0 : index
    %327 = vector.load %arg11[%c0_67, %c0_68] : memref<8x8xf32, #tpu.memory_space<vmem>>, vector<8x8xf32>
    tpu.vector_store %arg11[%c0_67, %c0_68], %326 {strides = array<i32>} : memref<8x8xf32, #tpu.memory_space<vmem>>, vector<8x8xf32>,
    return
  }
}

</mosaic_0001>

<llo_original>
// kernel: lstm_network_forward.1
$region0: #{lstm_network_forward.1}
  #allocation0 [shape = 'u32[]', space=smem, size = 0x4, offset = 0x4, fixed_abs, tag = 'smem constant byte address 0x4 - core index']
  #allocation1 [shape = 'u32[144,128]{1,0:T(1,128)}', space=vmem, size = 0x12000, scoped, tag = 'internal scratch']
  %s0 = inlined_call_operand.vmem [shape: f32[64,4], index: 0, kind: input, shape index: {}]
  %s1 = inlined_call_operand.vmem [shape: f32[4,128], index: 1, kind: input, shape index: {}]
  %s2 = inlined_call_operand.vmem [shape: f32[32,128], index: 2, kind: input, shape index: {}]
  %s3 = inlined_call_operand.vmem [shape: f32[1,128], index: 3, kind: input, shape index: {}]
  %s4 = inlined_call_operand.vmem [shape: f32[32,128], index: 4, kind: input, shape index: {}]
  %s5 = inlined_call_operand.vmem [shape: f32[32,128], index: 5, kind: input, shape index: {}]
  %s6 = inlined_call_operand.vmem [shape: f32[1,128], index: 6, kind: input, shape index: {}]
  %s7 = inlined_call_operand.vmem [shape: f32[8,15], index: 7, kind: input, shape index: {}]
  %s8 = inlined_call_operand.vmem [shape: f32[32,8], index: 8, kind: input, shape index: {}]
  %s9 = inlined_call_operand.vmem [shape: f32[15,8], index: 9, kind: input, shape index: {}]
  %s10 = inlined_call_operand.vmem [shape: f32[1,8], index: 10, kind: input, shape index: {}]
  %s11 = inlined_call_operand.vmem [shape: f32[8,8], index: 11, kind: output, shape index: {}]
  %s12 = sld [smem:[#allocation0]]
  $region54: #{lstm_network_forward.1} parent=0
    _
  %s14 = ssub.s32 1, %s12
  %s15 = scalar_select 0, %s14, %s12
  // Predicated region
  $region2: #{lstm_network_forward.1} parent=0 // pred_check
    _
  $region3: #{lstm_network_forward.1} parent=0 // pred_check_branch
    %17 = sbr.rel (0) target = $region5
  $region4: #{lstm_network_forward.1} parent=0 // pred_region
    _
  $region5: #{lstm_network_forward.1} parent=0 // pred_fallthru
    _
  // Predicated region
  $region6: #{lstm_network_forward.1} parent=0 // pred_check
    _
  $region7: #{lstm_network_forward.1} parent=0 // pred_check_branch
    %19 = sbr.rel (0) target = $region9
  $region8: #{lstm_network_forward.1} parent=0 // pred_region
    _
  $region9: #{lstm_network_forward.1} parent=0 // pred_fallthru
    _
  // Predicated region
  $region10: #{lstm_network_forward.1} parent=0 // pred_check
    _
  $region11: #{lstm_network_forward.1} parent=0 // pred_check_branch
    %21 = sbr.rel (0) target = $region13
  $region12: #{lstm_network_forward.1} parent=0 // pred_region
    _
  $region13: #{lstm_network_forward.1} parent=0 // pred_fallthru
    _
  // Predicated region
  $region14: #{lstm_network_forward.1} parent=0 // pred_check
    _
  $region15: #{lstm_network_forward.1} parent=0 // pred_check_branch
    %23 = sbr.rel (0) target = $region17
  $region16: #{lstm_network_forward.1} parent=0 // pred_region
    _
  $region17: #{lstm_network_forward.1} parent=0 // pred_fallthru
    _
  // Predicated region
  $region18: #{lstm_network_forward.1} parent=0 // pred_check
    _
  $region19: #{lstm_network_forward.1} parent=0 // pred_check_branch
    %25 = sbr.rel (0) target = $region21
  $region20: #{lstm_network_forward.1} parent=0 // pred_region
    _
  $region21: #{lstm_network_forward.1} parent=0 // pred_fallthru
    _
  // Predicated region
  $region22: #{lstm_network_forward.1} parent=0 // pred_check
    _
  $region23: #{lstm_network_forward.1} parent=0 // pred_check_branch
    %27 = sbr.rel (0) target = $region25
  $region24: #{lstm_network_forward.1} parent=0 // pred_region
    _
  $region25: #{lstm_network_forward.1} parent=0 // pred_fallthru
    _
  // Predicated region
  $region26: #{lstm_network_forward.1} parent=0 // pred_check
    _
  $region27: #{lstm_network_forward.1} parent=0 // pred_check_branch
    %29 = sbr.rel (0) target = $region29
  $region28: #{lstm_network_forward.1} parent=0 // pred_region
    _
  $region29: #{lstm_network_forward.1} parent=0 // pred_fallthru
    _
  // Predicated region
  $region30: #{lstm_network_forward.1} parent=0 // pred_check
    _
  $region31: #{lstm_network_forward.1} parent=0 // pred_check_branch
    %31 = sbr.rel (0) target = $region33
  $region32: #{lstm_network_forward.1} parent=0 // pred_region
    _
  $region33: #{lstm_network_forward.1} parent=0 // pred_fallthru
    _
  // Predicated region
  $region34: #{lstm_network_forward.1} parent=0 // pred_check
    _
  $region35: #{lstm_network_forward.1} parent=0 // pred_check_branch
    %33 = sbr.rel (0) target = $region37
  $region36: #{lstm_network_forward.1} parent=0 // pred_region
    _
  $region37: #{lstm_network_forward.1} parent=0 // pred_fallthru
    _
  // Predicated region
  $region38: #{lstm_network_forward.1} parent=0 // pred_check
    _
  $region39: #{lstm_network_forward.1} parent=0 // pred_check_branch
    %35 = sbr.rel (0) target = $region41
  $region40: #{lstm_network_forward.1} parent=0 // pred_region
    _
  $region41: #{lstm_network_forward.1} parent=0 // pred_fallthru
    _
  // Predicated region
  $region42: #{lstm_network_forward.1} parent=0 // pred_check
    _
  $region43: #{lstm_network_forward.1} parent=0 // pred_check_branch
    %37 = sbr.rel (0) target = $region45
  $region44: #{lstm_network_forward.1} parent=0 // pred_region
    _
  $region45: #{lstm_network_forward.1} parent=0 // pred_fallthru
    _
  %v38 = vld [vmem:[%s0] sm:$0xff]
  %v39 = vld [vmem:[%s0 + $0x8] sm:$0xff]
  %v40 = vld [vmem:[%s0 + $0x10] sm:$0xff]
  %v41 = vld [vmem:[%s0 + $0x18] sm:$0xff]
  %v42 = vld [vmem:[%s0 + $0x20] sm:$0xff]
  %v43 = vld [vmem:[%s0 + $0x28] sm:$0xff]
  %v44 = vld [vmem:[%s0 + $0x30] sm:$0xff]
  %v45 = vld [vmem:[%s0 + $0x38] sm:$0xff]
  %v46 = vld [vmem:[%s1] sm:$0xf]
  %v47 = vld [vmem:[%s3] sm:$0x1]
  %v49 = vlaneseq
  %v50 = vshrl.u32 %v49, 7
  %v51 = vsub.s32 0, %v50
  %v52 = vrot.slane %v47, %v51
  %vm54 = vcmask 31744
  %v56 = vsel %vm54, %v38, 0
  %v59 = vsel %vm54, %v39, 0
  %v62 = vsel %vm54, %v40, 0
  %v65 = vsel %vm54, %v41, 0
  %v68 = vsel %vm54, %v42, 0
  %v71 = vsel %vm54, %v43, 0
  %v74 = vsel %vm54, %v44, 0
  %v77 = vsel %vm54, %v45, 0
  %vm79 = vcmask 1043456
  %v81 = vsel %vm79, %v46, 0
  %83 = vmatprep.subr.mxu0 0.0
  %84 = vmatpush1.msra.mxu0 %v81
  %85 = vmatprep.subr.mxu0 0.0
  %86 = vmatpush1.msra.mxu0 0.0
  %87 = vmatprep.subr.mxu0 0.0
  %88 = vmatpush1.msra.mxu0 0.0
  %89 = vmatprep.subr.mxu0 0.0
  %90 = vmatpush1.msra.mxu0 0.0
  %91 = vmatprep.subr.mxu0 0.0
  %92 = vmatpush1.msra.mxu0 0.0
  %93 = vmatprep.subr.mxu0 0.0
  %94 = vmatpush1.msra.mxu0 0.0
  %95 = vmatprep.subr.mxu0 0.0
  %96 = vmatpush1.msra.mxu0 0.0
  %97 = vmatprep.subr.mxu0 0.0
  %98 = vmatpush1.msra.mxu0 0.0
  %99 = vmatprep.subr.mxu0 0.0
  %100 = vmatpush1.msra.mxu0 0.0
  %101 = vmatprep.subr.mxu0 0.0
  %102 = vmatpush1.msra.mxu0 0.0
  %103 = vmatprep.subr.mxu0 0.0
  %104 = vmatpush1.msra.mxu0 0.0
  %105 = vmatprep.subr.mxu0 0.0
  %106 = vmatpush1.msra.mxu0 0.0
  %107 = vmatprep.subr.mxu0 0.0
  %108 = vmatpush1.msra.mxu0 0.0
  %109 = vmatprep.subr.mxu0 0.0
  %110 = vmatpush1.msra.mxu0 0.0
  %111 = vmatprep.subr.mxu0 0.0
  %112 = vmatpush1.msra.mxu0 0.0
  %113 = vmatprep.subr.mxu0 0.0
  %114 = vmatpush1.msra.mxu0 0.0
  %115 = vmatprep.subr.mxu0 0.0
  %116 = vmatpush1.msra.mxu0 0.0
  %117 = vmatprep.subr.mxu0 0.0
  %118 = vmatpush1.msra.mxu0 0.0
  %119 = vmatprep.subr.mxu0 0.0
  %120 = vmatpush1.msra.mxu0 0.0
  %121 = vmatprep.subr.mxu0 0.0
  %122 = vmatpush1.msra.mxu0 0.0
  %123 = vmatprep.subr.mxu0 0.0
  %124 = vmatpush1.msra.mxu0 0.0
  %125 = vmatprep.subr.mxu0 0.0
  %126 = vmatpush1.msra.mxu0 0.0
  %127 = vmatprep.subr.mxu0 0.0
  %128 = vmatpush1.msra.mxu0 0.0
  %129 = vmatprep.subr.mxu0 0.0
  %130 = vmatpush1.msra.mxu0 0.0
  %131 = vmatprep.subr.mxu0 0.0
  %132 = vmatpush1.msra.mxu0 0.0
  %133 = vmatprep.subr.mxu0 0.0
  %134 = vmatpush1.msra.mxu0 0.0
  %135 = vmatprep.subr.mxu0 0.0
  %136 = vmatpush1.msra.mxu0 0.0
  %137 = vmatprep.subr.mxu0 0.0
  %138 = vmatpush1.msra.mxu0 0.0
  %139 = vmatprep.subr.mxu0 0.0
  %140 = vmatpush1.msra.mxu0 0.0
  %141 = vmatprep.subr.mxu0 0.0
  %142 = vmatpush1.msra.mxu0 0.0
  %143 = vmatprep.subr.mxu0 0.0
  %144 = vmatpush1.msra.mxu0 0.0
  %145 = vmatprep.subr.mxu0 0.0
  %146 = vmatpush1.msra.mxu0 0.0
  %147 = vmatprep.mubr.f32.mxu0 0.0
  %148 = vmatmul.mubr.f32.gmra.mrb[0].mxu0 %v56
  %v149 = vpop.f32.mrb[0].mxu0
  %v150 = vadd.f32 %v52, %v149
  %v151 = vpop.f32.mrb[0].mxu0
  %152 = vmatprep.mubr.f32.mxu0 0.0
  %153 = vmatmul.mubr.f32.gmra.mrb[0].mxu0 %v59
  %v154 = vpop.f32.mrb[0].mxu0
  %v155 = vadd.f32 %v52, %v154
  %v156 = vpop.f32.mrb[0].mxu0
  %157 = vmatprep.mubr.f32.mxu0 0.0
  %158 = vmatmul.mubr.f32.gmra.mrb[0].mxu0 %v62
  %v159 = vpop.f32.mrb[0].mxu0
  %v160 = vadd.f32 %v52, %v159
  %v161 = vpop.f32.mrb[0].mxu0
  %162 = vmatprep.mubr.f32.mxu0 0.0
  %163 = vmatmul.mubr.f32.gmra.mrb[0].mxu0 %v65
  %v164 = vpop.f32.mrb[0].mxu0
  %v165 = vadd.f32 %v52, %v164
  %v166 = vpop.f32.mrb[0].mxu0
  %167 = vmatprep.mubr.f32.mxu0 0.0
  %168 = vmatmul.mubr.f32.gmra.mrb[0].mxu0 %v68
  %v169 = vpop.f32.mrb[0].mxu0
  %v170 = vadd.f32 %v52, %v169
  %v171 = vpop.f32.mrb[0].mxu0
  %172 = vmatprep.mubr.f32.mxu0 0.0
  %173 = vmatmul.mubr.f32.gmra.mrb[0].mxu0 %v71
  %v174 = vpop.f32.mrb[0].mxu0
  %v175 = vadd.f32 %v52, %v174
  %v176 = vpop.f32.mrb[0].mxu0
  %177 = vmatprep.mubr.f32.mxu0 0.0
  %178 = vmatmul.mubr.f32.gmra.mrb[0].mxu0 %v74
  %v179 = vpop.f32.mrb[0].mxu0
  %v180 = vadd.f32 %v52, %v179
  %v181 = vpop.f32.mrb[0].mxu0
  %182 = vmatprep.mubr.f32.mxu0 0.0
  %183 = vmatmul.mubr.f32.gmra.mrb[0].mxu0 %v77
  %v184 = vpop.f32.mrb[0].mxu0
  %v185 = vadd.f32 %v52, %v184
  %v186 = vpop.f32.mrb[0].mxu0
  %187 = vdwg.mxu0
  %v188 = vld [vmem:[%s2] sm:$0xff]
  %v189 = vld [vmem:[%s2 + $0x8] sm:$0xff]
  %v190 = vld [vmem:[%s2 + $0x10] sm:$0xff]
  %v191 = vld [vmem:[%s2 + $0x18] sm:$0xff]
  %v192 = vld [vmem:[%s4] sm:$0xff]
  %v193 = vld [vmem:[%s4 + $0x8] sm:$0xff]
  %v194 = vld [vmem:[%s4 + $0x10] sm:$0xff]
  %v195 = vld [vmem:[%s4 + $0x18] sm:$0xff]
  %v196 = vld [vmem:[%s5] sm:$0xff]
  %v197 = vld [vmem:[%s5 + $0x8] sm:$0xff]
  %v198 = vld [vmem:[%s5 + $0x10] sm:$0xff]
  %v199 = vld [vmem:[%s5 + $0x18] sm:$0xff]
  %v200 = vld [vmem:[%s6] sm:$0x1]
  %vm201 = vcmask 261120
  %v203 = vsel %vm201, 0.0, 0
  %205 = vmatprep.subr.mxu0 0.0
  %206 = vmatpush1.msra.mxu0 %v188
  %207 = vmatprep.subr.mxu0 0.0
  %208 = vmatpush1.msra.mxu0 %v189
  %209 = vmatprep.subr.mxu0 0.0
  %210 = vmatpush1.msra.mxu0 %v190
  %211 = vmatprep.subr.mxu0 0.0
  %212 = vmatpush1.msra.mxu0 %v191
  %213 = vmatprep.subr.mxu0 0.0
  %214 = vmatpush1.msra.mxu0 0.0
  %215 = vmatprep.subr.mxu0 0.0
  %216 = vmatpush1.msra.mxu0 0.0
  %217 = vmatprep.subr.mxu0 0.0
  %218 = vmatpush1.msra.mxu0 0.0
  %219 = vmatprep.subr.mxu0 0.0
  %220 = vmatpush1.msra.mxu0 0.0
  %221 = vmatprep.subr.mxu0 0.0
  %222 = vmatpush1.msra.mxu0 0.0
  %223 = vmatprep.subr.mxu0 0.0
  %224 = vmatpush1.msra.mxu0 0.0
  %225 = vmatprep.subr.mxu0 0.0
  %226 = vmatpush1.msra.mxu0 0.0
  %227 = vmatprep.subr.mxu0 0.0
  %228 = vmatpush1.msra.mxu0 0.0
  %229 = vmatprep.subr.mxu0 0.0
  %230 = vmatpush1.msra.mxu0 0.0
  %231 = vmatprep.subr.mxu0 0.0
  %232 = vmatpush1.msra.mxu0 0.0
  %233 = vmatprep.subr.mxu0 0.0
  %234 = vmatpush1.msra.mxu0 0.0
  %235 = vmatprep.subr.mxu0 0.0
  %236 = vmatpush1.msra.mxu0 0.0
  %237 = vmatprep.subr.mxu0 0.0
  %238 = vmatpush1.msra.mxu0 0.0
  %239 = vmatprep.subr.mxu0 0.0
  %240 = vmatpush1.msra.mxu0 0.0
  %241 = vmatprep.subr.mxu0 0.0
  %242 = vmatpush1.msra.mxu0 0.0
  %243 = vmatprep.subr.mxu0 0.0
  %244 = vmatpush1.msra.mxu0 0.0
  %245 = vmatprep.subr.mxu0 0.0
  %246 = vmatpush1.msra.mxu0 0.0
  %247 = vmatprep.subr.mxu0 0.0
  %248 = vmatpush1.msra.mxu0 0.0
  %249 = vmatprep.subr.mxu0 0.0
  %250 = vmatpush1.msra.mxu0 0.0
  %251 = vmatprep.subr.mxu0 0.0
  %252 = vmatpush1.msra.mxu0 0.0
  %253 = vmatprep.subr.mxu0 0.0
  %254 = vmatpush1.msra.mxu0 0.0
  %255 = vmatprep.subr.mxu0 0.0
  %256 = vmatpush1.msra.mxu0 0.0
  %257 = vmatprep.subr.mxu0 0.0
  %258 = vmatpush1.msra.mxu0 0.0
  %259 = vmatprep.subr.mxu0 0.0
  %260 = vmatpush1.msra.mxu0 0.0
  %261 = vmatprep.subr.mxu0 0.0
  %262 = vmatpush1.msra.mxu0 0.0
  %263 = vmatprep.subr.mxu0 0.0
  %264 = vmatpush1.msra.mxu0 0.0
  %265 = vmatprep.subr.mxu0 0.0
  %266 = vmatpush1.msra.mxu0 0.0
  %267 = vmatprep.subr.mxu0 0.0
  %268 = vmatpush1.msra.mxu0 0.0
  %269 = vmatprep.mubr.f32.mxu0 0.0
  %270 = vmatmul.mubr.f32.gmra.mrb[0].mxu0 %v203
  %v271 = vpop.f32.mrb[0].mxu0
  %v272 = vadd.f32 0.0, %v271
  %v273 = vpop.f32.mrb[0].mxu0
  %274 = vdwg.mxu0
  %v275 = vadd.f32 %v150, %v272
  %v276 = vxor.u32 %v275, 2147483648
  %v277 = vmul.f32 %v276, 1.442695
  %v278 = vpow.pop %v277
  %v279 = vadd.f32 %v278, 1.0
  %v280 = vrcp.pop %v279
  %v281 = vmul.f32 1.0, %v280
  %v282 = vtanh.pop %v275
  %v283 = vmul.f32 %v281, 0.0
  %285 = vrot.lane.b32.xlu0 %v282, 64
  %v286 = vpop.permute.xlu0 %285
  %v288 = vmul.f32 %v281, %v286
  %290 = vrot.lane.b32.xlu0 %v288, 32
  %v291 = vpop.permute.xlu0 %290
  %v293 = vadd.f32 %v283, %v291
  %v294 = vtanh.pop %v293
  %296 = vrot.lane.b32.xlu0 %v294, 64
  %v297 = vpop.permute.xlu0 %296
  %v299 = vmul.f32 %v281, %v297
  %300 = vmatprep.subr.mxu0 0.0
  %301 = vmatpush1.msra.mxu0 %v196
  %302 = vmatprep.subr.mxu0 0.0
  %303 = vmatpush1.msra.mxu0 %v197
  %304 = vmatprep.subr.mxu0 0.0
  %305 = vmatpush1.msra.mxu0 %v198
  %306 = vmatprep.subr.mxu0 0.0
  %307 = vmatpush1.msra.mxu0 %v199
  %308 = vmatprep.subr.mxu0 0.0
  %309 = vmatpush1.msra.mxu0 0.0
  %310 = vmatprep.subr.mxu0 0.0
  %311 = vmatpush1.msra.mxu0 0.0
  %312 = vmatprep.subr.mxu0 0.0
  %313 = vmatpush1.msra.mxu0 0.0
  %314 = vmatprep.subr.mxu0 0.0
  %315 = vmatpush1.msra.mxu0 0.0
  %316 = vmatprep.subr.mxu0 0.0
  %317 = vmatpush1.msra.mxu0 0.0
  %318 = vmatprep.subr.mxu0 0.0
  %319 = vmatpush1.msra.mxu0 0.0
  %320 = vmatprep.subr.mxu0 0.0
  %321 = vmatpush1.msra.mxu0 0.0
  %322 = vmatprep.subr.mxu0 0.0
  %323 = vmatpush1.msra.mxu0 0.0
  %324 = vmatprep.subr.mxu0 0.0
  %325 = vmatpush1.msra.mxu0 0.0
  %326 = vmatprep.subr.mxu0 0.0
  %327 = vmatpush1.msra.mxu0 0.0
  %328 = vmatprep.subr.mxu0 0.0
  %329 = vmatpush1.msra.mxu0 0.0
  %330 = vmatprep.subr.mxu0 0.0
  %331 = vmatpush1.msra.mxu0 0.0
  %332 = vmatprep.subr.mxu0 0.0
  %333 = vmatpush1.msra.mxu0 0.0
  %334 = vmatprep.subr.mxu0 0.0
  %335 = vmatpush1.msra.mxu0 0.0
  %336 = vmatprep.subr.mxu0 0.0
  %337 = vmatpush1.msra.mxu0 0.0
  %338 = vmatprep.subr.mxu0 0.0
  %339 = vmatpush1.msra.mxu0 0.0
  %340 = vmatprep.subr.mxu0 0.0
  %341 = vmatpush1.msra.mxu0 0.0
  %342 = vmatprep.subr.mxu0 0.0
  %343 = vmatpush1.msra.mxu0 0.0
  %344 = vmatprep.subr.mxu0 0.0
  %345 = vmatpush1.msra.mxu0 0.0
  %346 = vmatprep.subr.mxu0 0.0
  %347 = vmatpush1.msra.mxu0 0.0
  %348 = vmatprep.subr.mxu0 0.0
  %349 = vmatpush1.msra.mxu0 0.0
  %350 = vmatprep.subr.mxu0 0.0
  %351 = vmatpush1.msra.mxu0 0.0
  %352 = vmatprep.subr.mxu0 0.0
  %353 = vmatpush1.msra.mxu0 0.0
  %354 = vmatprep.subr.mxu0 0.0
  %355 = vmatpush1.msra.mxu0 0.0
  %356 = vmatprep.subr.mxu0 0.0
  %357 = vmatpush1.msra.mxu0 0.0
  %358 = vmatprep.subr.mxu0 0.0
  %359 = vmatpush1.msra.mxu0 0.0
  %360 = vmatprep.subr.mxu0 0.0
  %361 = vmatpush1.msra.mxu0 0.0
  %362 = vmatprep.subr.mxu0 0.0
  %363 = vmatpush1.msra.mxu0 0.0
  %364 = vmatprep.mubr.f32.mxu0 0.0
  %365 = vmatmul.mubr.f32.gmra.mrb[0].mxu0 %v203
  %v366 = vpop.f32.mrb[0].mxu0
  %v367 = vadd.f32 0.0, %v366
  %v368 = vpop.f32.mrb[0].mxu0
  %369 = vdwg.mxu0
  %371 = vrot.lane.b32.xlu0 %v299, 32
  %v372 = vpop.permute.xlu0 %371
  %v373 = vsel %vm201, %v372, 0
  %375 = vmatprep.subr.mxu0 0.0
  %376 = vmatpush1.msra.mxu0 %v192
  %377 = vmatprep.subr.mxu0 0.0
  %378 = vmatpush1.msra.mxu0 %v193
  %379 = vmatprep.subr.mxu0 0.0
  %380 = vmatpush1.msra.mxu0 %v194
  %381 = vmatprep.subr.mxu0 0.0
  %382 = vmatpush1.msra.mxu0 %v195
  %383 = vmatprep.subr.mxu0 0.0
  %384 = vmatpush1.msra.mxu0 0.0
  %385 = vmatprep.subr.mxu0 0.0
  %386 = vmatpush1.msra.mxu0 0.0
  %387 = vmatprep.subr.mxu0 0.0
  %388 = vmatpush1.msra.mxu0 0.0
  %389 = vmatprep.subr.mxu0 0.0
  %390 = vmatpush1.msra.mxu0 0.0
  %391 = vmatprep.subr.mxu0 0.0
  %392 = vmatpush1.msra.mxu0 0.0
  %393 = vmatprep.subr.mxu0 0.0
  %394 = vmatpush1.msra.mxu0 0.0
  %395 = vmatprep.subr.mxu0 0.0
  %396 = vmatpush1.msra.mxu0 0.0
  %397 = vmatprep.subr.mxu0 0.0
  %398 = vmatpush1.msra.mxu0 0.0
  %399 = vmatprep.subr.mxu0 0.0
  %400 = vmatpush1.msra.mxu0 0.0
  %401 = vmatprep.subr.mxu0 0.0
  %402 = vmatpush1.msra.mxu0 0.0
  %403 = vmatprep.subr.mxu0 0.0
  %404 = vmatpush1.msra.mxu0 0.0
  %405 = vmatprep.subr.mxu0 0.0
  %406 = vmatpush1.msra.mxu0 0.0
  %407 = vmatprep.subr.mxu0 0.0
  %408 = vmatpush1.msra.mxu0 0.0
  %409 = vmatprep.subr.mxu0 0.0
  %410 = vmatpush1.msra.mxu0 0.0
  %411 = vmatprep.subr.mxu0 0.0
  %412 = vmatpush1.msra.mxu0 0.0
  %413 = vmatprep.subr.mxu0 0.0
  %414 = vmatpush1.msra.mxu0 0.0
  %415 = vmatprep.subr.mxu0 0.0
  %416 = vmatpush1.msra.mxu0 0.0
  %417 = vmatprep.subr.mxu0 0.0
  %418 = vmatpush1.msra.mxu0 0.0
  %419 = vmatprep.subr.mxu0 0.0
  %420 = vmatpush1.msra.mxu0 0.0
  %421 = vmatprep.subr.mxu0 0.0
  %422 = vmatpush1.msra.mxu0 0.0
  %423 = vmatprep.subr.mxu0 0.0
  %424 = vmatpush1.msra.mxu0 0.0
  %425 = vmatprep.subr.mxu0 0.0
  %426 = vmatpush1.msra.mxu0 0.0
  %427 = vmatprep.subr.mxu0 0.0
  %428 = vmatpush1.msra.mxu0 0.0
  %429 = vmatprep.subr.mxu0 0.0
  %430 = vmatpush1.msra.mxu0 0.0
  %431 = vmatprep.subr.mxu0 0.0
  %432 = vmatpush1.msra.mxu0 0.0
  %433 = vmatprep.subr.mxu0 0.0
  %434 = vmatpush1.msra.mxu0 0.0
  %435 = vmatprep.subr.mxu0 0.0
  %436 = vmatpush1.msra.mxu0 0.0
  %437 = vmatprep.subr.mxu0 0.0
  %438 = vmatpush1.msra.mxu0 0.0
  %439 = vmatprep.mubr.f32.mxu0 0.0
  %440 = vmatmul.mubr.f32.gmra.mrb[0].mxu0 %v373
  %v441 = vpop.f32.mrb[0].mxu0
  %v442 = vadd.f32 %v367, %v441
  %v443 = vpop.f32.mrb[0].mxu0
  %444 = vdwg.mxu0
  %v446 = vlaneseq
  %v447 = vshrl.u32 %v446, 7
  %v448 = vsub.s32 0, %v447
  %v449 = vrot.slane %v200, %v448
  %v451 = vadd.f32 %v442, %v449
  %v452 = vxor.u32 %v451, 2147483648
  %v453 = vmul.f32 %v452, 1.442695
  %v454 = vpow.pop %v453
  %v455 = vadd.f32 %v454, 1.0
  %v456 = vrcp.pop %v455
  %v457 = vmul.f32 1.0, %v456
  %v458 = vtanh.pop %v451
  %v459 = vmul.f32 %v457, 0.0
  %461 = vrot.lane.b32.xlu0 %v458, 64
  %v462 = vpop.permute.xlu0 %461
  %v464 = vmul.f32 %v457, %v462
  %466 = vrot.lane.b32.xlu0 %v464, 32
  %v467 = vpop.permute.xlu0 %466
  %v469 = vadd.f32 %v459, %v467
  %v470 = vtanh.pop %v469
  %472 = vrot.lane.b32.xlu0 %v470, 64
  %v473 = vpop.permute.xlu0 %472
  %v475 = vmul.f32 %v457, %v473
  %476 = vmatprep.subr.mxu0 0.0
  %477 = vmatpush1.msra.mxu0 %v188
  %478 = vmatprep.subr.mxu0 0.0
  %479 = vmatpush1.msra.mxu0 %v189
  %480 = vmatprep.subr.mxu0 0.0
  %481 = vmatpush1.msra.mxu0 %v190
  %482 = vmatprep.subr.mxu0 0.0
  %483 = vmatpush1.msra.mxu0 %v191
  %484 = vmatprep.subr.mxu0 0.0
  %485 = vmatpush1.msra.mxu0 0.0
  %486 = vmatprep.subr.mxu0 0.0
  %487 = vmatpush1.msra.mxu0 0.0
  %488 = vmatprep.subr.mxu0 0.0
  %489 = vmatpush1.msra.mxu0 0.0
  %490 = vmatprep.subr.mxu0 0.0
  %491 = vmatpush1.msra.mxu0 0.0
  %492 = vmatprep.subr.mxu0 0.0
  %493 = vmatpush1.msra.mxu0 0.0
  %494 = vmatprep.subr.mxu0 0.0
  %495 = vmatpush1.msra.mxu0 0.0
  %496 = vmatprep.subr.mxu0 0.0
  %497 = vmatpush1.msra.mxu0 0.0
  %498 = vmatprep.subr.mxu0 0.0
  %499 = vmatpush1.msra.mxu0 0.0
  %500 = vmatprep.subr.mxu0 0.0
  %501 = vmatpush1.msra.mxu0 0.0
  %502 = vmatprep.subr.mxu0 0.0
  %503 = vmatpush1.msra.mxu0 0.0
  %504 = vmatprep.subr.mxu0 0.0
  %505 = vmatpush1.msra.mxu0 0.0
  %506 = vmatprep.subr.mxu0 0.0
  %507 = vmatpush1.msra.mxu0 0.0
  %508 = vmatprep.subr.mxu0 0.0
  %509 = vmatpush1.msra.mxu0 0.0
  %510 = vmatprep.subr.mxu0 0.0
  %511 = vmatpush1.msra.mxu0 0.0
  %512 = vmatprep.subr.mxu0 0.0
  %513 = vmatpush1.msra.mxu0 0.0
  %514 = vmatprep.subr.mxu0 0.0
  %515 = vmatpush1.msra.mxu0 0.0
  %516 = vmatprep.subr.mxu0 0.0
  %517 = vmatpush1.msra.mxu0 0.0
  %518 = vmatprep.subr.mxu0 0.0
  %519 = vmatpush1.msra.mxu0 0.0
  %520 = vmatprep.subr.mxu0 0.0
  %521 = vmatpush1.msra.mxu0 0.0
  %522 = vmatprep.subr.mxu0 0.0
  %523 = vmatpush1.msra.mxu0 0.0
  %524 = vmatprep.subr.mxu0 0.0
  %525 = vmatpush1.msra.mxu0 0.0
  %526 = vmatprep.subr.mxu0 0.0
  %527 = vmatpush1.msra.mxu0 0.0
  %528 = vmatprep.subr.mxu0 0.0
  %529 = vmatpush1.msra.mxu0 0.0
  %530 = vmatprep.subr.mxu0 0.0
  %531 = vmatpush1.msra.mxu0 0.0
  %532 = vmatprep.subr.mxu0 0.0
  %533 = vmatpush1.msra.mxu0 0.0
  %534 = vmatprep.subr.mxu0 0.0
  %535 = vmatpush1.msra.mxu0 0.0
  %536 = vmatprep.subr.mxu0 0.0
  %537 = vmatpush1.msra.mxu0 0.0
  %538 = vmatprep.subr.mxu0 0.0
  %539 = vmatpush1.msra.mxu0 0.0
  %540 = vmatprep.mubr.f32.mxu0 0.0
  %541 = vmatmul.mubr.f32.gmra.mrb[0].mxu0 %v373
  %v542 = vpop.f32.mrb[0].mxu0
  %v543 = vadd.f32 0.0, %v542
  %v544 = vpop.f32.mrb[0].mxu0
  %545 = vdwg.mxu0
  %v546 = vadd.f32 %v155, %v543
  %v547 = vxor.u32 %v546, 2147483648
  %v548 = vmul.f32 %v547, 1.442695
  %v549 = vpow.pop %v548
  %v550 = vadd.f32 %v549, 1.0
  %v551 = vrcp.pop %v550
  %v552 = vmul.f32 1.0, %v551
  %v553 = vtanh.pop %v546
  %v554 = vmul.f32 %v552, %v293
  %556 = vrot.lane.b32.xlu0 %v553, 64
  %v557 = vpop.permute.xlu0 %556
  %v559 = vmul.f32 %v552, %v557
  %561 = vrot.lane.b32.xlu0 %v559, 32
  %v562 = vpop.permute.xlu0 %561
  %v564 = vadd.f32 %v554, %v562
  %v565 = vtanh.pop %v564
  %567 = vrot.lane.b32.xlu0 %v565, 64
  %v568 = vpop.permute.xlu0 %567
  %v570 = vmul.f32 %v552, %v568
  %572 = vrot.lane.b32.xlu0 %v475, 32
  %v573 = vpop.permute.xlu0 %572
  %v574 = vsel %vm201, %v573, 0
  %576 = vmatprep.subr.mxu0 0.0
  %577 = vmatpush1.msra.mxu0 %v196
  %578 = vmatprep.subr.mxu0 0.0
  %579 = vmatpush1.msra.mxu0 %v197
  %580 = vmatprep.subr.mxu0 0.0
  %581 = vmatpush1.msra.mxu0 %v198
  %582 = vmatprep.subr.mxu0 0.0
  %583 = vmatpush1.msra.mxu0 %v199
  %584 = vmatprep.subr.mxu0 0.0
  %585 = vmatpush1.msra.mxu0 0.0
  %586 = vmatprep.subr.mxu0 0.0
  %587 = vmatpush1.msra.mxu0 0.0
  %588 = vmatprep.subr.mxu0 0.0
  %589 = vmatpush1.msra.mxu0 0.0
  %590 = vmatprep.subr.mxu0 0.0
  %591 = vmatpush1.msra.mxu0 0.0
  %592 = vmatprep.subr.mxu0 0.0
  %593 = vmatpush1.msra.mxu0 0.0
  %594 = vmatprep.subr.mxu0 0.0
  %595 = vmatpush1.msra.mxu0 0.0
  %596 = vmatprep.subr.mxu0 0.0
  %597 = vmatpush1.msra.mxu0 0.0
  %598 = vmatprep.subr.mxu0 0.0
  %599 = vmatpush1.msra.mxu0 0.0
  %600 = vmatprep.subr.mxu0 0.0
  %601 = vmatpush1.msra.mxu0 0.0
  %602 = vmatprep.subr.mxu0 0.0
  %603 = vmatpush1.msra.mxu0 0.0
  %604 = vmatprep.subr.mxu0 0.0
  %605 = vmatpush1.msra.mxu0 0.0
  %606 = vmatprep.subr.mxu0 0.0
  %607 = vmatpush1.msra.mxu0 0.0
  %608 = vmatprep.subr.mxu0 0.0
  %609 = vmatpush1.msra.mxu0 0.0
  %610 = vmatprep.subr.mxu0 0.0
  %611 = vmatpush1.msra.mxu0 0.0
  %612 = vmatprep.subr.mxu0 0.0
  %613 = vmatpush1.msra.mxu0 0.0
  %614 = vmatprep.subr.mxu0 0.0
  %615 = vmatpush1.msra.mxu0 0.0
  %616 = vmatprep.subr.mxu0 0.0
  %617 = vmatpush1.msra.mxu0 0.0
  %618 = vmatprep.subr.mxu0 0.0
  %619 = vmatpush1.msra.mxu0 0.0
  %620 = vmatprep.subr.mxu0 0.0
  %621 = vmatpush1.msra.mxu0 0.0
  %622 = vmatprep.subr.mxu0 0.0
  %623 = vmatpush1.msra.mxu0 0.0
  %624 = vmatprep.subr.mxu0 0.0
  %625 = vmatpush1.msra.mxu0 0.0
  %626 = vmatprep.subr.mxu0 0.0
  %627 = vmatpush1.msra.mxu0 0.0
  %628 = vmatprep.subr.mxu0 0.0
  %629 = vmatpush1.msra.mxu0 0.0
  %630 = vmatprep.subr.mxu0 0.0
  %631 = vmatpush1.msra.mxu0 0.0
  %632 = vmatprep.subr.mxu0 0.0
  %633 = vmatpush1.msra.mxu0 0.0
  %634 = vmatprep.subr.mxu0 0.0
  %635 = vmatpush1.msra.mxu0 0.0
  %636 = vmatprep.subr.mxu0 0.0
  %637 = vmatpush1.msra.mxu0 0.0
  %638 = vmatprep.subr.mxu0 0.0
  %639 = vmatpush1.msra.mxu0 0.0
  %640 = vmatprep.mubr.f32.mxu0 0.0
  %641 = vmatmul.mubr.f32.gmra.mrb[0].mxu0 %v574
  %v642 = vpop.f32.mrb[0].mxu0
  %v643 = vadd.f32 0.0, %v642
  %v644 = vpop.f32.mrb[0].mxu0
  %645 = vdwg.mxu0
  %647 = vrot.lane.b32.xlu0 %v570, 32
  %v648 = vpop.permute.xlu0 %647
  %v649 = vsel %vm201, %v648, 0
  %651 = vmatprep.subr.mxu0 0.0
  %652 = vmatpush1.msra.mxu0 %v192
  %653 = vmatprep.subr.mxu0 0.0
  %654 = vmatpush1.msra.mxu0 %v193
  %655 = vmatprep.subr.mxu0 0.0
  %656 = vmatpush1.msra.mxu0 %v194
  %657 = vmatprep.subr.mxu0 0.0
  %658 = vmatpush1.msra.mxu0 %v195
  %659 = vmatprep.subr.mxu0 0.0
  %660 = vmatpush1.msra.mxu0 0.0
  %661 = vmatprep.subr.mxu0 0.0
  %662 = vmatpush1.msra.mxu0 0.0
  %663 = vmatprep.subr.mxu0 0.0
  %664 = vmatpush1.msra.mxu0 0.0
  %665 = vmatprep.subr.mxu0 0.0
  %666 = vmatpush1.msra.mxu0 0.0
  %667 = vmatprep.subr.mxu0 0.0
  %668 = vmatpush1.msra.mxu0 0.0
  %669 = vmatprep.subr.mxu0 0.0
  %670 = vmatpush1.msra.mxu0 0.0
  %671 = vmatprep.subr.mxu0 0.0
  %672 = vmatpush1.msra.mxu0 0.0
  %673 = vmatprep.subr.mxu0 0.0
  %674 = vmatpush1.msra.mxu0 0.0
  %675 = vmatprep.subr.mxu0 0.0
  %676 = vmatpush1.msra.mxu0 0.0
  %677 = vmatprep.subr.mxu0 0.0
  %678 = vmatpush1.msra.mxu0 0.0
  %679 = vmatprep.subr.mxu0 0.0
  %680 = vmatpush1.msra.mxu0 0.0
  %681 = vmatprep.subr.mxu0 0.0
  %682 = vmatpush1.msra.mxu0 0.0
  %683 = vmatprep.subr.mxu0 0.0
  %684 = vmatpush1.msra.mxu0 0.0
  %685 = vmatprep.subr.mxu0 0.0
  %686 = vmatpush1.msra.mxu0 0.0
  %687 = vmatprep.subr.mxu0 0.0
  %688 = vmatpush1.msra.mxu0 0.0
  %689 = vmatprep.subr.mxu0 0.0
  %690 = vmatpush1.msra.mxu0 0.0
  %691 = vmatprep.subr.mxu0 0.0
  %692 = vmatpush1.msra.mxu0 0.0
  %693 = vmatprep.subr.mxu0 0.0
  %694 = vmatpush1.msra.mxu0 0.0
  %695 = vmatprep.subr.mxu0 0.0
  %696 = vmatpush1.msra.mxu0 0.0
  %697 = vmatprep.subr.mxu0 0.0
  %698 = vmatpush1.msra.mxu0 0.0
  %699 = vmatprep.subr.mxu0 0.0
  %700 = vmatpush1.msra.mxu0 0.0
  %701 = vmatprep.subr.mxu0 0.0
  %702 = vmatpush1.msra.mxu0 0.0
  %703 = vmatprep.subr.mxu0 0.0
  %704 = vmatpush1.msra.mxu0 0.0
  %705 = vmatprep.subr.mxu0 0.0
  %706 = vmatpush1.msra.mxu0 0.0
  %707 = vmatprep.subr.mxu0 0.0
  %708 = vmatpush1.msra.mxu0 0.0
  %709 = vmatprep.subr.mxu0 0.0
  %710 = vmatpush1.msra.mxu0 0.0
  %711 = vmatprep.subr.mxu0 0.0
  %712 = vmatpush1.msra.mxu0 0.0
  %713 = vmatprep.subr.mxu0 0.0
  %714 = vmatpush1.msra.mxu0 0.0
  %715 = vmatprep.mubr.f32.mxu0 0.0
  %716 = vmatmul.mubr.f32.gmra.mrb[0].mxu0 %v649
  %v717 = vpop.f32.mrb[0].mxu0
  %v718 = vadd.f32 %v643, %v717
  %v719 = vpop.f32.mrb[0].mxu0
  %720 = vdwg.mxu0
  %v721 = vadd.f32 %v718, %v449
  %v722 = vxor.u32 %v721, 2147483648
  %v723 = vmul.f32 %v722, 1.442695
  %v724 = vpow.pop %v723
  %v725 = vadd.f32 %v724, 1.0
  %v726 = vrcp.pop %v725
  %v727 = vmul.f32 1.0, %v726
  %v728 = vtanh.pop %v721
  %v729 = vmul.f32 %v727, %v469
  %731 = vrot.lane.b32.xlu0 %v728, 64
  %v732 = vpop.permute.xlu0 %731
  %v734 = vmul.f32 %v727, %v732
  %736 = vrot.lane.b32.xlu0 %v734, 32
  %v737 = vpop.permute.xlu0 %736
  %v739 = vadd.f32 %v729, %v737
  %v740 = vtanh.pop %v739
  %742 = vrot.lane.b32.xlu0 %v740, 64
  %v743 = vpop.permute.xlu0 %742
  %v745 = vmul.f32 %v727, %v743
  %746 = vmatprep.subr.mxu0 0.0
  %747 = vmatpush1.msra.mxu0 %v188
  %748 = vmatprep.subr.mxu0 0.0
  %749 = vmatpush1.msra.mxu0 %v189
  %750 = vmatprep.subr.mxu0 0.0
  %751 = vmatpush1.msra.mxu0 %v190
  %752 = vmatprep.subr.mxu0 0.0
  %753 = vmatpush1.msra.mxu0 %v191
  %754 = vmatprep.subr.mxu0 0.0
  %755 = vmatpush1.msra.mxu0 0.0
  %756 = vmatprep.subr.mxu0 0.0
  %757 = vmatpush1.msra.mxu0 0.0
  %758 = vmatprep.subr.mxu0 0.0
  %759 = vmatpush1.msra.mxu0 0.0
  %760 = vmatprep.subr.mxu0 0.0
  %761 = vmatpush1.msra.mxu0 0.0
  %762 = vmatprep.subr.mxu0 0.0
  %763 = vmatpush1.msra.mxu0 0.0
  %764 = vmatprep.subr.mxu0 0.0
  %765 = vmatpush1.msra.mxu0 0.0
  %766 = vmatprep.subr.mxu0 0.0
  %767 = vmatpush1.msra.mxu0 0.0
  %768 = vmatprep.subr.mxu0 0.0
  %769 = vmatpush1.msra.mxu0 0.0
  %770 = vmatprep.subr.mxu0 0.0
  %771 = vmatpush1.msra.mxu0 0.0
  %772 = vmatprep.subr.mxu0 0.0
  %773 = vmatpush1.msra.mxu0 0.0
  %774 = vmatprep.subr.mxu0 0.0
  %775 = vmatpush1.msra.mxu0 0.0
  %776 = vmatprep.subr.mxu0 0.0
  %777 = vmatpush1.msra.mxu0 0.0
  %778 = vmatprep.subr.mxu0 0.0
  %779 = vmatpush1.msra.mxu0 0.0
  %780 = vmatprep.subr.mxu0 0.0
  %781 = vmatpush1.msra.mxu0 0.0
  %782 = vmatprep.subr.mxu0 0.0
  %783 = vmatpush1.msra.mxu0 0.0
  %784 = vmatprep.subr.mxu0 0.0
  %785 = vmatpush1.msra.mxu0 0.0
  %786 = vmatprep.subr.mxu0 0.0
  %787 = vmatpush1.msra.mxu0 0.0
  %788 = vmatprep.subr.mxu0 0.0
  %789 = vmatpush1.msra.mxu0 0.0
  %790 = vmatprep.subr.mxu0 0.0
  %791 = vmatpush1.msra.mxu0 0.0
  %792 = vmatprep.subr.mxu0 0.0
  %793 = vmatpush1.msra.mxu0 0.0
  %794 = vmatprep.subr.mxu0 0.0
  %795 = vmatpush1.msra.mxu0 0.0
  %796 = vmatprep.subr.mxu0 0.0
  %797 = vmatpush1.msra.mxu0 0.0
  %798 = vmatprep.subr.mxu0 0.0
  %799 = vmatpush1.msra.mxu0 0.0
  %800 = vmatprep.subr.mxu0 0.0
  %801 = vmatpush1.msra.mxu0 0.0
  %802 = vmatprep.subr.mxu0 0.0
  %803 = vmatpush1.msra.mxu0 0.0
  %804 = vmatprep.subr.mxu0 0.0
  %805 = vmatpush1.msra.mxu0 0.0
  %806 = vmatprep.subr.mxu0 0.0
  %807 = vmatpush1.msra.mxu0 0.0
  %808 = vmatprep.subr.mxu0 0.0
  %809 = vmatpush1.msra.mxu0 0.0
  %810 = vmatprep.mubr.f32.mxu0 0.0
  %811 = vmatmul.mubr.f32.gmra.mrb[0].mxu0 %v649
  %v812 = vpop.f32.mrb[0].mxu0
  %v813 = vadd.f32 0.0, %v812
  %v814 = vpop.f32.mrb[0].mxu0
  %815 = vdwg.mxu0
  %v816 = vadd.f32 %v160, %v813
  %v817 = vxor.u32 %v816, 2147483648
  %v818 = vmul.f32 %v817, 1.442695
  %v819 = vpow.pop %v818
  %v820 = vadd.f32 %v819, 1.0
  %v821 = vrcp.pop %v820
  %v822 = vmul.f32 1.0, %v821
  %v823 = vtanh.pop %v816
  %v824 = vmul.f32 %v822, %v564
  %826 = vrot.lane.b32.xlu0 %v823, 64
  %v827 = vpop.permute.xlu0 %826
  %v829 = vmul.f32 %v822, %v827
  %831 = vrot.lane.b32.xlu0 %v829, 32
  %v832 = vpop.permute.xlu0 %831
  %v834 = vadd.f32 %v824, %v832
  %v835 = vtanh.pop %v834
  %837 = vrot.lane.b32.xlu0 %v835, 64
  %v838 = vpop.permute.xlu0 %837
  %v840 = vmul.f32 %v822, %v838
  %842 = vrot.lane.b32.xlu0 %v745, 32
  %v843 = vpop.permute.xlu0 %842
  %v844 = vsel %vm201, %v843, 0
  %846 = vmatprep.subr.mxu0 0.0
  %847 = vmatpush1.msra.mxu0 %v196
  %848 = vmatprep.subr.mxu0 0.0
  %849 = vmatpush1.msra.mxu0 %v197
  %850 = vmatprep.subr.mxu0 0.0
  %851 = vmatpush1.msra.mxu0 %v198
  %852 = vmatprep.subr.mxu0 0.0
  %853 = vmatpush1.msra.mxu0 %v199
  %854 = vmatprep.subr.mxu0 0.0
  %855 = vmatpush1.msra.mxu0 0.0
  %856 = vmatprep.subr.mxu0 0.0
  %857 = vmatpush1.msra.mxu0 0.0
  %858 = vmatprep.subr.mxu0 0.0
  %859 = vmatpush1.msra.mxu0 0.0
  %860 = vmatprep.subr.mxu0 0.0
  %861 = vmatpush1.msra.mxu0 0.0
  %862 = vmatprep.subr.mxu0 0.0
  %863 = vmatpush1.msra.mxu0 0.0
  %864 = vmatprep.subr.mxu0 0.0
  %865 = vmatpush1.msra.mxu0 0.0
  %866 = vmatprep.subr.mxu0 0.0
  %867 = vmatpush1.msra.mxu0 0.0
  %868 = vmatprep.subr.mxu0 0.0
  %869 = vmatpush1.msra.mxu0 0.0
  %870 = vmatprep.subr.mxu0 0.0
  %871 = vmatpush1.msra.mxu0 0.0
  %872 = vmatprep.subr.mxu0 0.0
  %873 = vmatpush1.msra.mxu0 0.0
  %874 = vmatprep.subr.mxu0 0.0
  %875 = vmatpush1.msra.mxu0 0.0
  %876 = vmatprep.subr.mxu0 0.0
  %877 = vmatpush1.msra.mxu0 0.0
  %878 = vmatprep.subr.mxu0 0.0
  %879 = vmatpush1.msra.mxu0 0.0
  %880 = vmatprep.subr.mxu0 0.0
  %881 = vmatpush1.msra.mxu0 0.0
  %882 = vmatprep.subr.mxu0 0.0
  %883 = vmatpush1.msra.mxu0 0.0
  %884 = vmatprep.subr.mxu0 0.0
  %885 = vmatpush1.msra.mxu0 0.0
  %886 = vmatprep.subr.mxu0 0.0
  %887 = vmatpush1.msra.mxu0 0.0
  %888 = vmatprep.subr.mxu0 0.0
  %889 = vmatpush1.msra.mxu0 0.0
  %890 = vmatprep.subr.mxu0 0.0
  %891 = vmatpush1.msra.mxu0 0.0
  %892 = vmatprep.subr.mxu0 0.0
  %893 = vmatpush1.msra.mxu0 0.0
  %894 = vmatprep.subr.mxu0 0.0
  %895 = vmatpush1.msra.mxu0 0.0
  %896 = vmatprep.subr.mxu0 0.0
  %897 = vmatpush1.msra.mxu0 0.0
  %898 = vmatprep.subr.mxu0 0.0
  %899 = vmatpush1.msra.mxu0 0.0
  %900 = vmatprep.subr.mxu0 0.0
  %901 = vmatpush1.msra.mxu0 0.0
  %902 = vmatprep.subr.mxu0 0.0
  %903 = vmatpush1.msra.mxu0 0.0
  %904 = vmatprep.subr.mxu0 0.0
  %905 = vmatpush1.msra.mxu0 0.0
  %906 = vmatprep.subr.mxu0 0.0
  %907 = vmatpush1.msra.mxu0 0.0
  %908 = vmatprep.subr.mxu0 0.0
  %909 = vmatpush1.msra.mxu0 0.0
  %910 = vmatprep.mubr.f32.mxu0 0.0
  %911 = vmatmul.mubr.f32.gmra.mrb[0].mxu0 %v844
  %v912 = vpop.f32.mrb[0].mxu0
  %v913 = vadd.f32 0.0, %v912
  %v914 = vpop.f32.mrb[0].mxu0
  %915 = vdwg.mxu0
  %917 = vrot.lane.b32.xlu0 %v840, 32
  %v918 = vpop.permute.xlu0 %917
  %v919 = vsel %vm201, %v918, 0
  %921 = vmatprep.subr.mxu0 0.0
  %922 = vmatpush1.msra.mxu0 %v192
  %923 = vmatprep.subr.mxu0 0.0
  %924 = vmatpush1.msra.mxu0 %v193
  %925 = vmatprep.subr.mxu0 0.0
  %926 = vmatpush1.msra.mxu0 %v194
  %927 = vmatprep.subr.mxu0 0.0
  %928 = vmatpush1.msra.mxu0 %v195
  %929 = vmatprep.subr.mxu0 0.0
  %930 = vmatpush1.msra.mxu0 0.0
  %931 = vmatprep.subr.mxu0 0.0
  %932 = vmatpush1.msra.mxu0 0.0
  %933 = vmatprep.subr.mxu0 0.0
  %934 = vmatpush1.msra.mxu0 0.0
  %935 = vmatprep.subr.mxu0 0.0
  %936 = vmatpush1.msra.mxu0 0.0
  %937 = vmatprep.subr.mxu0 0.0
  %938 = vmatpush1.msra.mxu0 0.0
  %939 = vmatprep.subr.mxu0 0.0
  %940 = vmatpush1.msra.mxu0 0.0
  %941 = vmatprep.subr.mxu0 0.0
  %942 = vmatpush1.msra.mxu0 0.0
  %943 = vmatprep.subr.mxu0 0.0
  %944 = vmatpush1.msra.mxu0 0.0
  %945 = vmatprep.subr.mxu0 0.0
  %946 = vmatpush1.msra.mxu0 0.0
  %947 = vmatprep.subr.mxu0 0.0
  %948 = vmatpush1.msra.mxu0 0.0
  %949 = vmatprep.subr.mxu0 0.0
  %950 = vmatpush1.msra.mxu0 0.0
  %951 = vmatprep.subr.mxu0 0.0
  %952 = vmatpush1.msra.mxu0 0.0
  %953 = vmatprep.subr.mxu0 0.0
  %954 = vmatpush1.msra.mxu0 0.0
  %955 = vmatprep.subr.mxu0 0.0
  %956 = vmatpush1.msra.mxu0 0.0
  %957 = vmatprep.subr.mxu0 0.0
  %958 = vmatpush1.msra.mxu0 0.0
  %959 = vmatprep.subr.mxu0 0.0
  %960 = vmatpush1.msra.mxu0 0.0
  %961 = vmatprep.subr.mxu0 0.0
  %962 = vmatpush1.msra.mxu0 0.0
  %963 = vmatprep.subr.mxu0 0.0
  %964 = vmatpush1.msra.mxu0 0.0
  %965 = vmatprep.subr.mxu0 0.0
  %966 = vmatpush1.msra.mxu0 0.0
  %967 = vmatprep.subr.mxu0 0.0
  %968 = vmatpush1.msra.mxu0 0.0
  %969 = vmatprep.subr.mxu0 0.0
  %970 = vmatpush1.msra.mxu0 0.0
  %971 = vmatprep.subr.mxu0 0.0
  %972 = vmatpush1.msra.mxu0 0.0
  %973 = vmatprep.subr.mxu0 0.0
  %974 = vmatpush1.msra.mxu0 0.0
  %975 = vmatprep.subr.mxu0 0.0
  %976 = vmatpush1.msra.mxu0 0.0
  %977 = vmatprep.subr.mxu0 0.0
  %978 = vmatpush1.msra.mxu0 0.0
  %979 = vmatprep.subr.mxu0 0.0
  %980 = vmatpush1.msra.mxu0 0.0
  %981 = vmatprep.subr.mxu0 0.0
  %982 = vmatpush1.msra.mxu0 0.0
  %983 = vmatprep.subr.mxu0 0.0
  %984 = vmatpush1.msra.mxu0 0.0
  %985 = vmatprep.mubr.f32.mxu0 0.0
  %986 = vmatmul.mubr.f32.gmra.mrb[0].mxu0 %v919
  %v987 = vpop.f32.mrb[0].mxu0
  %v988 = vadd.f32 %v913, %v987
  %v989 = vpop.f32.mrb[0].mxu0
  %990 = vdwg.mxu0
  %v991 = vadd.f32 %v988, %v449
  %v992 = vxor.u32 %v991, 2147483648
  %v993 = vmul.f32 %v992, 1.442695
  %v994 = vpow.pop %v993
  %v995 = vadd.f32 %v994, 1.0
  %v996 = vrcp.pop %v995
  %v997 = vmul.f32 1.0, %v996
  %v998 = vtanh.pop %v991
  %v999 = vmul.f32 %v997, %v739
  %1001 = vrot.lane.b32.xlu0 %v998, 64
  %v1002 = vpop.permute.xlu0 %1001
  %v1004 = vmul.f32 %v997, %v1002
  %1006 = vrot.lane.b32.xlu0 %v1004, 32
  %v1007 = vpop.permute.xlu0 %1006
  %v1009 = vadd.f32 %v999, %v1007
  %v1010 = vtanh.pop %v1009
  %1012 = vrot.lane.b32.xlu0 %v1010, 64
  %v1013 = vpop.permute.xlu0 %1012
  %v1015 = vmul.f32 %v997, %v1013
  %1016 = vmatprep.subr.mxu0 0.0
  %1017 = vmatpush1.msra.mxu0 %v188
  %1018 = vmatprep.subr.mxu0 0.0
  %1019 = vmatpush1.msra.mxu0 %v189
  %1020 = vmatprep.subr.mxu0 0.0
  %1021 = vmatpush1.msra.mxu0 %v190
  %1022 = vmatprep.subr.mxu0 0.0
  %1023 = vmatpush1.msra.mxu0 %v191
  %1024 = vmatprep.subr.mxu0 0.0
  %1025 = vmatpush1.msra.mxu0 0.0
  %1026 = vmatprep.subr.mxu0 0.0
  %1027 = vmatpush1.msra.mxu0 0.0
  %1028 = vmatprep.subr.mxu0 0.0
  %1029 = vmatpush1.msra.mxu0 0.0
  %1030 = vmatprep.subr.mxu0 0.0
  %1031 = vmatpush1.msra.mxu0 0.0
  %1032 = vmatprep.subr.mxu0 0.0
  %1033 = vmatpush1.msra.mxu0 0.0
  %1034 = vmatprep.subr.mxu0 0.0
  %1035 = vmatpush1.msra.mxu0 0.0
  %1036 = vmatprep.subr.mxu0 0.0
  %1037 = vmatpush1.msra.mxu0 0.0
  %1038 = vmatprep.subr.mxu0 0.0
  %1039 = vmatpush1.msra.mxu0 0.0
  %1040 = vmatprep.subr.mxu0 0.0
  %1041 = vmatpush1.msra.mxu0 0.0
  %1042 = vmatprep.subr.mxu0 0.0
  %1043 = vmatpush1.msra.mxu0 0.0
  %1044 = vmatprep.subr.mxu0 0.0
  %1045 = vmatpush1.msra.mxu0 0.0
  %1046 = vmatprep.subr.mxu0 0.0
  %1047 = vmatpush1.msra.mxu0 0.0
  %1048 = vmatprep.subr.mxu0 0.0
  %1049 = vmatpush1.msra.mxu0 0.0
  %1050 = vmatprep.subr.mxu0 0.0
  %1051 = vmatpush1.msra.mxu0 0.0
  %1052 = vmatprep.subr.mxu0 0.0
  %1053 = vmatpush1.msra.mxu0 0.0
  %1054 = vmatprep.subr.mxu0 0.0
  %1055 = vmatpush1.msra.mxu0 0.0
  %1056 = vmatprep.subr.mxu0 0.0
  %1057 = vmatpush1.msra.mxu0 0.0
  %1058 = vmatprep.subr.mxu0 0.0
  %1059 = vmatpush1.msra.mxu0 0.0
  %1060 = vmatprep.subr.mxu0 0.0
  %1061 = vmatpush1.msra.mxu0 0.0
  %1062 = vmatprep.subr.mxu0 0.0
  %1063 = vmatpush1.msra.mxu0 0.0
  %1064 = vmatprep.subr.mxu0 0.0
  %1065 = vmatpush1.msra.mxu0 0.0
  %1066 = vmatprep.subr.mxu0 0.0
  %1067 = vmatpush1.msra.mxu0 0.0
  %1068 = vmatprep.subr.mxu0 0.0
  %1069 = vmatpush1.msra.mxu0 0.0
  %1070 = vmatprep.subr.mxu0 0.0
  %1071 = vmatpush1.msra.mxu0 0.0
  %1072 = vmatprep.subr.mxu0 0.0
  %1073 = vmatpush1.msra.mxu0 0.0
  %1074 = vmatprep.subr.mxu0 0.0
  %1075 = vmatpush1.msra.mxu0 0.0
  %1076 = vmatprep.subr.mxu0 0.0
  %1077 = vmatpush1.msra.mxu0 0.0
  %1078 = vmatprep.subr.mxu0 0.0
  %1079 = vmatpush1.msra.mxu0 0.0
  %1080 = vmatprep.mubr.f32.mxu0 0.0
  %1081 = vmatmul.mubr.f32.gmra.mrb[0].mxu0 %v919
  %v1082 = vpop.f32.mrb[0].mxu0
  %v1083 = vadd.f32 0.0, %v1082
  %v1084 = vpop.f32.mrb[0].mxu0
  %1085 = vdwg.mxu0
  %v1086 = vadd.f32 %v165, %v1083
  %v1087 = vxor.u32 %v1086, 2147483648
  %v1088 = vmul.f32 %v1087, 1.442695
  %v1089 = vpow.pop %v1088
  %v1090 = vadd.f32 %v1089, 1.0
  %v1091 = vrcp.pop %v1090
  %v1092 = vmul.f32 1.0, %v1091
  %v1093 = vtanh.pop %v1086
  %v1094 = vmul.f32 %v1092, %v834
  %1096 = vrot.lane.b32.xlu0 %v1093, 64
  %v1097 = vpop.permute.xlu0 %1096
  %v1099 = vmul.f32 %v1092, %v1097
  %1101 = vrot.lane.b32.xlu0 %v1099, 32
  %v1102 = vpop.permute.xlu0 %1101
  %v1104 = vadd.f32 %v1094, %v1102
  %v1105 = vtanh.pop %v1104
  %1107 = vrot.lane.b32.xlu0 %v1105, 64
  %v1108 = vpop.permute.xlu0 %1107
  %v1110 = vmul.f32 %v1092, %v1108
  %1112 = vrot.lane.b32.xlu0 %v1015, 32
  %v1113 = vpop.permute.xlu0 %1112
  %v1114 = vsel %vm201, %v1113, 0
  %1116 = vmatprep.subr.mxu0 0.0
  %1117 = vmatpush1.msra.mxu0 %v196
  %1118 = vmatprep.subr.mxu0 0.0
  %1119 = vmatpush1.msra.mxu0 %v197
  %1120 = vmatprep.subr.mxu0 0.0
  %1121 = vmatpush1.msra.mxu0 %v198
  %1122 = vmatprep.subr.mxu0 0.0
  %1123 = vmatpush1.msra.mxu0 %v199
  %1124 = vmatprep.subr.mxu0 0.0
  %1125 = vmatpush1.msra.mxu0 0.0
  %1126 = vmatprep.subr.mxu0 0.0
  %1127 = vmatpush1.msra.mxu0 0.0
  %1128 = vmatprep.subr.mxu0 0.0
  %1129 = vmatpush1.msra.mxu0 0.0
  %1130 = vmatprep.subr.mxu0 0.0
  %1131 = vmatpush1.msra.mxu0 0.0
  %1132 = vmatprep.subr.mxu0 0.0
  %1133 = vmatpush1.msra.mxu0 0.0
  %1134 = vmatprep.subr.mxu0 0.0
  %1135 = vmatpush1.msra.mxu0 0.0
  %1136 = vmatprep.subr.mxu0 0.0
  %1137 = vmatpush1.msra.mxu0 0.0
  %1138 = vmatprep.subr.mxu0 0.0
  %1139 = vmatpush1.msra.mxu0 0.0
  %1140 = vmatprep.subr.mxu0 0.0
  %1141 = vmatpush1.msra.mxu0 0.0
  %1142 = vmatprep.subr.mxu0 0.0
  %1143 = vmatpush1.msra.mxu0 0.0
  %1144 = vmatprep.subr.mxu0 0.0
  %1145 = vmatpush1.msra.mxu0 0.0
  %1146 = vmatprep.subr.mxu0 0.0
  %1147 = vmatpush1.msra.mxu0 0.0
  %1148 = vmatprep.subr.mxu0 0.0
  %1149 = vmatpush1.msra.mxu0 0.0
  %1150 = vmatprep.subr.mxu0 0.0
  %1151 = vmatpush1.msra.mxu0 0.0
  %1152 = vmatprep.subr.mxu0 0.0
  %1153 = vmatpush1.msra.mxu0 0.0
  %1154 = vmatprep.subr.mxu0 0.0
  %1155 = vmatpush1.msra.mxu0 0.0
  %1156 = vmatprep.subr.mxu0 0.0
  %1157 = vmatpush1.msra.mxu0 0.0
  %1158 = vmatprep.subr.mxu0 0.0
  %1159 = vmatpush1.msra.mxu0 0.0
  %1160 = vmatprep.subr.mxu0 0.0
  %1161 = vmatpush1.msra.mxu0 0.0
  %1162 = vmatprep.subr.mxu0 0.0
  %1163 = vmatpush1.msra.mxu0 0.0
  %1164 = vmatprep.subr.mxu0 0.0
  %1165 = vmatpush1.msra.mxu0 0.0
  %1166 = vmatprep.subr.mxu0 0.0
  %1167 = vmatpush1.msra.mxu0 0.0
  %1168 = vmatprep.subr.mxu0 0.0
  %1169 = vmatpush1.msra.mxu0 0.0
  %1170 = vmatprep.subr.mxu0 0.0
  %1171 = vmatpush1.msra.mxu0 0.0
  %1172 = vmatprep.subr.mxu0 0.0
  %1173 = vmatpush1.msra.mxu0 0.0
  %1174 = vmatprep.subr.mxu0 0.0
  %1175 = vmatpush1.msra.mxu0 0.0
  %1176 = vmatprep.subr.mxu0 0.0
  %1177 = vmatpush1.msra.mxu0 0.0
  %1178 = vmatprep.subr.mxu0 0.0
  %1179 = vmatpush1.msra.mxu0 0.0
  %1180 = vmatprep.mubr.f32.mxu0 0.0
  %1181 = vmatmul.mubr.f32.gmra.mrb[0].mxu0 %v1114
  %v1182 = vpop.f32.mrb[0].mxu0
  %v1183 = vadd.f32 0.0, %v1182
  %v1184 = vpop.f32.mrb[0].mxu0
  %1185 = vdwg.mxu0
  %1187 = vrot.lane.b32.xlu0 %v1110, 32
  %v1188 = vpop.permute.xlu0 %1187
  %v1189 = vsel %vm201, %v1188, 0
  %1191 = vmatprep.subr.mxu0 0.0
  %1192 = vmatpush1.msra.mxu0 %v192
  %1193 = vmatprep.subr.mxu0 0.0
  %1194 = vmatpush1.msra.mxu0 %v193
  %1195 = vmatprep.subr.mxu0 0.0
  %1196 = vmatpush1.msra.mxu0 %v194
  %1197 = vmatprep.subr.mxu0 0.0
  %1198 = vmatpush1.msra.mxu0 %v195
  %1199 = vmatprep.subr.mxu0 0.0
  %1200 = vmatpush1.msra.mxu0 0.0
  %1201 = vmatprep.subr.mxu0 0.0
  %1202 = vmatpush1.msra.mxu0 0.0
  %1203 = vmatprep.subr.mxu0 0.0
  %1204 = vmatpush1.msra.mxu0 0.0
  %1205 = vmatprep.subr.mxu0 0.0
  %1206 = vmatpush1.msra.mxu0 0.0
  %1207 = vmatprep.subr.mxu0 0.0
  %1208 = vmatpush1.msra.mxu0 0.0
  %1209 = vmatprep.subr.mxu0 0.0
  %1210 = vmatpush1.msra.mxu0 0.0
  %1211 = vmatprep.subr.mxu0 0.0
  %1212 = vmatpush1.msra.mxu0 0.0
  %1213 = vmatprep.subr.mxu0 0.0
  %1214 = vmatpush1.msra.mxu0 0.0
  %1215 = vmatprep.subr.mxu0 0.0
  %1216 = vmatpush1.msra.mxu0 0.0
  %1217 = vmatprep.subr.mxu0 0.0
  %1218 = vmatpush1.msra.mxu0 0.0
  %1219 = vmatprep.subr.mxu0 0.0
  %1220 = vmatpush1.msra.mxu0 0.0
  %1221 = vmatprep.subr.mxu0 0.0
  %1222 = vmatpush1.msra.mxu0 0.0
  %1223 = vmatprep.subr.mxu0 0.0
  %1224 = vmatpush1.msra.mxu0 0.0
  %1225 = vmatprep.subr.mxu0 0.0
  %1226 = vmatpush1.msra.mxu0 0.0
  %1227 = vmatprep.subr.mxu0 0.0
  %1228 = vmatpush1.msra.mxu0 0.0
  %1229 = vmatprep.subr.mxu0 0.0
  %1230 = vmatpush1.msra.mxu0 0.0
  %1231 = vmatprep.subr.mxu0 0.0
  %1232 = vmatpush1.msra.mxu0 0.0
  %1233 = vmatprep.subr.mxu0 0.0
  %1234 = vmatpush1.msra.mxu0 0.0
  %1235 = vmatprep.subr.mxu0 0.0
  %1236 = vmatpush1.msra.mxu0 0.0
  %1237 = vmatprep.subr.mxu0 0.0
  %1238 = vmatpush1.msra.mxu0 0.0
  %1239 = vmatprep.subr.mxu0 0.0
  %1240 = vmatpush1.msra.mxu0 0.0
  %1241 = vmatprep.subr.mxu0 0.0
  %1242 = vmatpush1.msra.mxu0 0.0
  %1243 = vmatprep.subr.mxu0 0.0
  %1244 = vmatpush1.msra.mxu0 0.0
  %1245 = vmatprep.subr.mxu0 0.0
  %1246 = vmatpush1.msra.mxu0 0.0
  %1247 = vmatprep.subr.mxu0 0.0
  %1248 = vmatpush1.msra.mxu0 0.0
  %1249 = vmatprep.subr.mxu0 0.0
  %1250 = vmatpush1.msra.mxu0 0.0
  %1251 = vmatprep.subr.mxu0 0.0
  %1252 = vmatpush1.msra.mxu0 0.0
  %1253 = vmatprep.subr.mxu0 0.0
  %1254 = vmatpush1.msra.mxu0 0.0
  %1255 = vmatprep.mubr.f32.mxu0 0.0
  %1256 = vmatmul.mubr.f32.gmra.mrb[0].mxu0 %v1189
  %v1257 = vpop.f32.mrb[0].mxu0
  %v1258 = vadd.f32 %v1183, %v1257
  %v1259 = vpop.f32.mrb[0].mxu0
  %1260 = vdwg.mxu0
  %v1261 = vadd.f32 %v1258, %v449
  %v1262 = vxor.u32 %v1261, 2147483648
  %v1263 = vmul.f32 %v1262, 1.442695
  %v1264 = vpow.pop %v1263
  %v1265 = vadd.f32 %v1264, 1.0
  %v1266 = vrcp.pop %v1265
  %v1267 = vmul.f32 1.0, %v1266
  %v1268 = vtanh.pop %v1261
  %v1269 = vmul.f32 %v1267, %v1009
  %1271 = vrot.lane.b32.xlu0 %v1268, 64
  %v1272 = vpop.permute.xlu0 %1271
  %v1274 = vmul.f32 %v1267, %v1272
  %1276 = vrot.lane.b32.xlu0 %v1274, 32
  %v1277 = vpop.permute.xlu0 %1276
  %v1279 = vadd.f32 %v1269, %v1277
  %v1280 = vtanh.pop %v1279
  %1282 = vrot.lane.b32.xlu0 %v1280, 64
  %v1283 = vpop.permute.xlu0 %1282
  %v1285 = vmul.f32 %v1267, %v1283
  %1286 = vmatprep.subr.mxu0 0.0
  %1287 = vmatpush1.msra.mxu0 %v188
  %1288 = vmatprep.subr.mxu0 0.0
  %1289 = vmatpush1.msra.mxu0 %v189
  %1290 = vmatprep.subr.mxu0 0.0
  %1291 = vmatpush1.msra.mxu0 %v190
  %1292 = vmatprep.subr.mxu0 0.0
  %1293 = vmatpush1.msra.mxu0 %v191
  %1294 = vmatprep.subr.mxu0 0.0
  %1295 = vmatpush1.msra.mxu0 0.0
  %1296 = vmatprep.subr.mxu0 0.0
  %1297 = vmatpush1.msra.mxu0 0.0
  %1298 = vmatprep.subr.mxu0 0.0
  %1299 = vmatpush1.msra.mxu0 0.0
  %1300 = vmatprep.subr.mxu0 0.0
  %1301 = vmatpush1.msra.mxu0 0.0
  %1302 = vmatprep.subr.mxu0 0.0
  %1303 = vmatpush1.msra.mxu0 0.0
  %1304 = vmatprep.subr.mxu0 0.0
  %1305 = vmatpush1.msra.mxu0 0.0
  %1306 = vmatprep.subr.mxu0 0.0
  %1307 = vmatpush1.msra.mxu0 0.0
  %1308 = vmatprep.subr.mxu0 0.0
  %1309 = vmatpush1.msra.mxu0 0.0
  %1310 = vmatprep.subr.mxu0 0.0
  %1311 = vmatpush1.msra.mxu0 0.0
  %1312 = vmatprep.subr.mxu0 0.0
  %1313 = vmatpush1.msra.mxu0 0.0
  %1314 = vmatprep.subr.mxu0 0.0
  %1315 = vmatpush1.msra.mxu0 0.0
  %1316 = vmatprep.subr.mxu0 0.0
  %1317 = vmatpush1.msra.mxu0 0.0
  %1318 = vmatprep.subr.mxu0 0.0
  %1319 = vmatpush1.msra.mxu0 0.0
  %1320 = vmatprep.subr.mxu0 0.0
  %1321 = vmatpush1.msra.mxu0 0.0
  %1322 = vmatprep.subr.mxu0 0.0
  %1323 = vmatpush1.msra.mxu0 0.0
  %1324 = vmatprep.subr.mxu0 0.0
  %1325 = vmatpush1.msra.mxu0 0.0
  %1326 = vmatprep.subr.mxu0 0.0
  %1327 = vmatpush1.msra.mxu0 0.0
  %1328 = vmatprep.subr.mxu0 0.0
  %1329 = vmatpush1.msra.mxu0 0.0
  %1330 = vmatprep.subr.mxu0 0.0
  %1331 = vmatpush1.msra.mxu0 0.0
  %1332 = vmatprep.subr.mxu0 0.0
  %1333 = vmatpush1.msra.mxu0 0.0
  %1334 = vmatprep.subr.mxu0 0.0
  %1335 = vmatpush1.msra.mxu0 0.0
  %1336 = vmatprep.subr.mxu0 0.0
  %1337 = vmatpush1.msra.mxu0 0.0
  %1338 = vmatprep.subr.mxu0 0.0
  %1339 = vmatpush1.msra.mxu0 0.0
  %1340 = vmatprep.subr.mxu0 0.0
  %1341 = vmatpush1.msra.mxu0 0.0
  %1342 = vmatprep.subr.mxu0 0.0
  %1343 = vmatpush1.msra.mxu0 0.0
  %1344 = vmatprep.subr.mxu0 0.0
  %1345 = vmatpush1.msra.mxu0 0.0
  %1346 = vmatprep.subr.mxu0 0.0
  %1347 = vmatpush1.msra.mxu0 0.0
  %1348 = vmatprep.subr.mxu0 0.0
  %1349 = vmatpush1.msra.mxu0 0.0
  %1350 = vmatprep.mubr.f32.mxu0 0.0
  %1351 = vmatmul.mubr.f32.gmra.mrb[0].mxu0 %v1189
  %v1352 = vpop.f32.mrb[0].mxu0
  %v1353 = vadd.f32 0.0, %v1352
  %v1354 = vpop.f32.mrb[0].mxu0
  %1355 = vdwg.mxu0
  %v1356 = vadd.f32 %v170, %v1353
  %v1357 = vxor.u32 %v1356, 2147483648
  %v1358 = vmul.f32 %v1357, 1.442695
  %v1359 = vpow.pop %v1358
  %v1360 = vadd.f32 %v1359, 1.0
  %v1361 = vrcp.pop %v1360
  %v1362 = vmul.f32 1.0, %v1361
  %v1363 = vtanh.pop %v1356
  %v1364 = vmul.f32 %v1362, %v1104
  %1366 = vrot.lane.b32.xlu0 %v1363, 64
  %v1367 = vpop.permute.xlu0 %1366
  %v1369 = vmul.f32 %v1362, %v1367
  %1371 = vrot.lane.b32.xlu0 %v1369, 32
  %v1372 = vpop.permute.xlu0 %1371
  %v1374 = vadd.f32 %v1364, %v1372
  %v1375 = vtanh.pop %v1374
  %1377 = vrot.lane.b32.xlu0 %v1375, 64
  %v1378 = vpop.permute.xlu0 %1377
  %v1380 = vmul.f32 %v1362, %v1378
  %1382 = vrot.lane.b32.xlu0 %v1285, 32
  %v1383 = vpop.permute.xlu0 %1382
  %v1384 = vsel %vm201, %v1383, 0
  %1386 = vmatprep.subr.mxu0 0.0
  %1387 = vmatpush1.msra.mxu0 %v196
  %1388 = vmatprep.subr.mxu0 0.0
  %1389 = vmatpush1.msra.mxu0 %v197
  %1390 = vmatprep.subr.mxu0 0.0
  %1391 = vmatpush1.msra.mxu0 %v198
  %1392 = vmatprep.subr.mxu0 0.0
  %1393 = vmatpush1.msra.mxu0 %v199
  %1394 = vmatprep.subr.mxu0 0.0
  %1395 = vmatpush1.msra.mxu0 0.0
  %1396 = vmatprep.subr.mxu0 0.0
  %1397 = vmatpush1.msra.mxu0 0.0
  %1398 = vmatprep.subr.mxu0 0.0
  %1399 = vmatpush1.msra.mxu0 0.0
  %1400 = vmatprep.subr.mxu0 0.0
  %1401 = vmatpush1.msra.mxu0 0.0
  %1402 = vmatprep.subr.mxu0 0.0
  %1403 = vmatpush1.msra.mxu0 0.0
  %1404 = vmatprep.subr.mxu0 0.0
  %1405 = vmatpush1.msra.mxu0 0.0
  %1406 = vmatprep.subr.mxu0 0.0
  %1407 = vmatpush1.msra.mxu0 0.0
  %1408 = vmatprep.subr.mxu0 0.0
  %1409 = vmatpush1.msra.mxu0 0.0
  %1410 = vmatprep.subr.mxu0 0.0
  %1411 = vmatpush1.msra.mxu0 0.0
  %1412 = vmatprep.subr.mxu0 0.0
  %1413 = vmatpush1.msra.mxu0 0.0
  %1414 = vmatprep.subr.mxu0 0.0
  %1415 = vmatpush1.msra.mxu0 0.0
  %1416 = vmatprep.subr.mxu0 0.0
  %1417 = vmatpush1.msra.mxu0 0.0
  %1418 = vmatprep.subr.mxu0 0.0
  %1419 = vmatpush1.msra.mxu0 0.0
  %1420 = vmatprep.subr.mxu0 0.0
  %1421 = vmatpush1.msra.mxu0 0.0
  %1422 = vmatprep.subr.mxu0 0.0
  %1423 = vmatpush1.msra.mxu0 0.0
  %1424 = vmatprep.subr.mxu0 0.0
  %1425 = vmatpush1.msra.mxu0 0.0
  %1426 = vmatprep.subr.mxu0 0.0
  %1427 = vmatpush1.msra.mxu0 0.0
  %1428 = vmatprep.subr.mxu0 0.0
  %1429 = vmatpush1.msra.mxu0 0.0
  %1430 = vmatprep.subr.mxu0 0.0
  %1431 = vmatpush1.msra.mxu0 0.0
  %1432 = vmatprep.subr.mxu0 0.0
  %1433 = vmatpush1.msra.mxu0 0.0
  %1434 = vmatprep.subr.mxu0 0.0
  %1435 = vmatpush1.msra.mxu0 0.0
  %1436 = vmatprep.subr.mxu0 0.0
  %1437 = vmatpush1.msra.mxu0 0.0
  %1438 = vmatprep.subr.mxu0 0.0
  %1439 = vmatpush1.msra.mxu0 0.0
  %1440 = vmatprep.subr.mxu0 0.0
  %1441 = vmatpush1.msra.mxu0 0.0
  %1442 = vmatprep.subr.mxu0 0.0
  %1443 = vmatpush1.msra.mxu0 0.0
  %1444 = vmatprep.subr.mxu0 0.0
  %1445 = vmatpush1.msra.mxu0 0.0
  %1446 = vmatprep.subr.mxu0 0.0
  %1447 = vmatpush1.msra.mxu0 0.0
  %1448 = vmatprep.subr.mxu0 0.0
  %1449 = vmatpush1.msra.mxu0 0.0
  %1450 = vmatprep.mubr.f32.mxu0 0.0
  %1451 = vmatmul.mubr.f32.gmra.mrb[0].mxu0 %v1384
  %v1452 = vpop.f32.mrb[0].mxu0
  %v1453 = vadd.f32 0.0, %v1452
  %v1454 = vpop.f32.mrb[0].mxu0
  %1455 = vdwg.mxu0
  %1457 = vrot.lane.b32.xlu0 %v1380, 32
  %v1458 = vpop.permute.xlu0 %1457
  %v1459 = vsel %vm201, %v1458, 0
  %1461 = vmatprep.subr.mxu0 0.0
  %1462 = vmatpush1.msra.mxu0 %v192
  %1463 = vmatprep.subr.mxu0 0.0
  %1464 = vmatpush1.msra.mxu0 %v193
  %1465 = vmatprep.subr.mxu0 0.0
  %1466 = vmatpush1.msra.mxu0 %v194
  %1467 = vmatprep.subr.mxu0 0.0
  %1468 = vmatpush1.msra.mxu0 %v195
  %1469 = vmatprep.subr.mxu0 0.0
  %1470 = vmatpush1.msra.mxu0 0.0
  %1471 = vmatprep.subr.mxu0 0.0
  %1472 = vmatpush1.msra.mxu0 0.0
  %1473 = vmatprep.subr.mxu0 0.0
  %1474 = vmatpush1.msra.mxu0 0.0
  %1475 = vmatprep.subr.mxu0 0.0
  %1476 = vmatpush1.msra.mxu0 0.0
  %1477 = vmatprep.subr.mxu0 0.0
  %1478 = vmatpush1.msra.mxu0 0.0
  %1479 = vmatprep.subr.mxu0 0.0
  %1480 = vmatpush1.msra.mxu0 0.0
  %1481 = vmatprep.subr.mxu0 0.0
  %1482 = vmatpush1.msra.mxu0 0.0
  %1483 = vmatprep.subr.mxu0 0.0
  %1484 = vmatpush1.msra.mxu0 0.0
  %1485 = vmatprep.subr.mxu0 0.0
  %1486 = vmatpush1.msra.mxu0 0.0
  %1487 = vmatprep.subr.mxu0 0.0
  %1488 = vmatpush1.msra.mxu0 0.0
  %1489 = vmatprep.subr.mxu0 0.0
  %1490 = vmatpush1.msra.mxu0 0.0
  %1491 = vmatprep.subr.mxu0 0.0
  %1492 = vmatpush1.msra.mxu0 0.0
  %1493 = vmatprep.subr.mxu0 0.0
  %1494 = vmatpush1.msra.mxu0 0.0
  %1495 = vmatprep.subr.mxu0 0.0
  %1496 = vmatpush1.msra.mxu0 0.0
  %1497 = vmatprep.subr.mxu0 0.0
  %1498 = vmatpush1.msra.mxu0 0.0
  %1499 = vmatprep.subr.mxu0 0.0
  %1500 = vmatpush1.msra.mxu0 0.0
  %1501 = vmatprep.subr.mxu0 0.0
  %1502 = vmatpush1.msra.mxu0 0.0
  %1503 = vmatprep.subr.mxu0 0.0
  %1504 = vmatpush1.msra.mxu0 0.0
  %1505 = vmatprep.subr.mxu0 0.0
  %1506 = vmatpush1.msra.mxu0 0.0
  %1507 = vmatprep.subr.mxu0 0.0
  %1508 = vmatpush1.msra.mxu0 0.0
  %1509 = vmatprep.subr.mxu0 0.0
  %1510 = vmatpush1.msra.mxu0 0.0
  %1511 = vmatprep.subr.mxu0 0.0
  %1512 = vmatpush1.msra.mxu0 0.0
  %1513 = vmatprep.subr.mxu0 0.0
  %1514 = vmatpush1.msra.mxu0 0.0
  %1515 = vmatprep.subr.mxu0 0.0
  %1516 = vmatpush1.msra.mxu0 0.0
  %1517 = vmatprep.subr.mxu0 0.0
  %1518 = vmatpush1.msra.mxu0 0.0
  %1519 = vmatprep.subr.mxu0 0.0
  %1520 = vmatpush1.msra.mxu0 0.0
  %1521 = vmatprep.subr.mxu0 0.0
  %1522 = vmatpush1.msra.mxu0 0.0
  %1523 = vmatprep.subr.mxu0 0.0
  %1524 = vmatpush1.msra.mxu0 0.0
  %1525 = vmatprep.mubr.f32.mxu0 0.0
  %1526 = vmatmul.mubr.f32.gmra.mrb[0].mxu0 %v1459
  %v1527 = vpop.f32.mrb[0].mxu0
  %v1528 = vadd.f32 %v1453, %v1527
  %v1529 = vpop.f32.mrb[0].mxu0
  %1530 = vdwg.mxu0
  %v1531 = vadd.f32 %v1528, %v449
  %v1532 = vxor.u32 %v1531, 2147483648
  %v1533 = vmul.f32 %v1532, 1.442695
  %v1534 = vpow.pop %v1533
  %v1535 = vadd.f32 %v1534, 1.0
  %v1536 = vrcp.pop %v1535
  %v1537 = vmul.f32 1.0, %v1536
  %v1538 = vtanh.pop %v1531
  %v1539 = vmul.f32 %v1537, %v1279
  %1541 = vrot.lane.b32.xlu0 %v1538, 64
  %v1542 = vpop.permute.xlu0 %1541
  %v1544 = vmul.f32 %v1537, %v1542
  %1546 = vrot.lane.b32.xlu0 %v1544, 32
  %v1547 = vpop.permute.xlu0 %1546
  %v1549 = vadd.f32 %v1539, %v1547
  %v1550 = vtanh.pop %v1549
  %1552 = vrot.lane.b32.xlu0 %v1550, 64
  %v1553 = vpop.permute.xlu0 %1552
  %v1555 = vmul.f32 %v1537, %v1553
  %1556 = vmatprep.subr.mxu0 0.0
  %1557 = vmatpush1.msra.mxu0 %v188
  %1558 = vmatprep.subr.mxu0 0.0
  %1559 = vmatpush1.msra.mxu0 %v189
  %1560 = vmatprep.subr.mxu0 0.0
  %1561 = vmatpush1.msra.mxu0 %v190
  %1562 = vmatprep.subr.mxu0 0.0
  %1563 = vmatpush1.msra.mxu0 %v191
  %1564 = vmatprep.subr.mxu0 0.0
  %1565 = vmatpush1.msra.mxu0 0.0
  %1566 = vmatprep.subr.mxu0 0.0
  %1567 = vmatpush1.msra.mxu0 0.0
  %1568 = vmatprep.subr.mxu0 0.0
  %1569 = vmatpush1.msra.mxu0 0.0
  %1570 = vmatprep.subr.mxu0 0.0
  %1571 = vmatpush1.msra.mxu0 0.0
  %1572 = vmatprep.subr.mxu0 0.0
  %1573 = vmatpush1.msra.mxu0 0.0
  %1574 = vmatprep.subr.mxu0 0.0
  %1575 = vmatpush1.msra.mxu0 0.0
  %1576 = vmatprep.subr.mxu0 0.0
  %1577 = vmatpush1.msra.mxu0 0.0
  %1578 = vmatprep.subr.mxu0 0.0
  %1579 = vmatpush1.msra.mxu0 0.0
  %1580 = vmatprep.subr.mxu0 0.0
  %1581 = vmatpush1.msra.mxu0 0.0
  %1582 = vmatprep.subr.mxu0 0.0
  %1583 = vmatpush1.msra.mxu0 0.0
  %1584 = vmatprep.subr.mxu0 0.0
  %1585 = vmatpush1.msra.mxu0 0.0
  %1586 = vmatprep.subr.mxu0 0.0
  %1587 = vmatpush1.msra.mxu0 0.0
  %1588 = vmatprep.subr.mxu0 0.0
  %1589 = vmatpush1.msra.mxu0 0.0
  %1590 = vmatprep.subr.mxu0 0.0
  %1591 = vmatpush1.msra.mxu0 0.0
  %1592 = vmatprep.subr.mxu0 0.0
  %1593 = vmatpush1.msra.mxu0 0.0
  %1594 = vmatprep.subr.mxu0 0.0
  %1595 = vmatpush1.msra.mxu0 0.0
  %1596 = vmatprep.subr.mxu0 0.0
  %1597 = vmatpush1.msra.mxu0 0.0
  %1598 = vmatprep.subr.mxu0 0.0
  %1599 = vmatpush1.msra.mxu0 0.0
  %1600 = vmatprep.subr.mxu0 0.0
  %1601 = vmatpush1.msra.mxu0 0.0
  %1602 = vmatprep.subr.mxu0 0.0
  %1603 = vmatpush1.msra.mxu0 0.0
  %1604 = vmatprep.subr.mxu0 0.0
  %1605 = vmatpush1.msra.mxu0 0.0
  %1606 = vmatprep.subr.mxu0 0.0
  %1607 = vmatpush1.msra.mxu0 0.0
  %1608 = vmatprep.subr.mxu0 0.0
  %1609 = vmatpush1.msra.mxu0 0.0
  %1610 = vmatprep.subr.mxu0 0.0
  %1611 = vmatpush1.msra.mxu0 0.0
  %1612 = vmatprep.subr.mxu0 0.0
  %1613 = vmatpush1.msra.mxu0 0.0
  %1614 = vmatprep.subr.mxu0 0.0
  %1615 = vmatpush1.msra.mxu0 0.0
  %1616 = vmatprep.subr.mxu0 0.0
  %1617 = vmatpush1.msra.mxu0 0.0
  %1618 = vmatprep.subr.mxu0 0.0
  %1619 = vmatpush1.msra.mxu0 0.0
  %1620 = vmatprep.mubr.f32.mxu0 0.0
  %1621 = vmatmul.mubr.f32.gmra.mrb[0].mxu0 %v1459
  %v1622 = vpop.f32.mrb[0].mxu0
  %v1623 = vadd.f32 0.0, %v1622
  %v1624 = vpop.f32.mrb[0].mxu0
  %1625 = vdwg.mxu0
  %v1626 = vadd.f32 %v175, %v1623
  %v1627 = vxor.u32 %v1626, 2147483648
  %v1628 = vmul.f32 %v1627, 1.442695
  %v1629 = vpow.pop %v1628
  %v1630 = vadd.f32 %v1629, 1.0
  %v1631 = vrcp.pop %v1630
  %v1632 = vmul.f32 1.0, %v1631
  %v1633 = vtanh.pop %v1626
  %v1634 = vmul.f32 %v1632, %v1374
  %1636 = vrot.lane.b32.xlu0 %v1633, 64
  %v1637 = vpop.permute.xlu0 %1636
  %v1639 = vmul.f32 %v1632, %v1637
  %1641 = vrot.lane.b32.xlu0 %v1639, 32
  %v1642 = vpop.permute.xlu0 %1641
  %v1644 = vadd.f32 %v1634, %v1642
  %v1645 = vtanh.pop %v1644
  %1647 = vrot.lane.b32.xlu0 %v1645, 64
  %v1648 = vpop.permute.xlu0 %1647
  %v1650 = vmul.f32 %v1632, %v1648
  %1652 = vrot.lane.b32.xlu0 %v1555, 32
  %v1653 = vpop.permute.xlu0 %1652
  %v1654 = vsel %vm201, %v1653, 0
  %1656 = vmatprep.subr.mxu0 0.0
  %1657 = vmatpush1.msra.mxu0 %v196
  %1658 = vmatprep.subr.mxu0 0.0
  %1659 = vmatpush1.msra.mxu0 %v197
  %1660 = vmatprep.subr.mxu0 0.0
  %1661 = vmatpush1.msra.mxu0 %v198
  %1662 = vmatprep.subr.mxu0 0.0
  %1663 = vmatpush1.msra.mxu0 %v199
  %1664 = vmatprep.subr.mxu0 0.0
  %1665 = vmatpush1.msra.mxu0 0.0
  %1666 = vmatprep.subr.mxu0 0.0
  %1667 = vmatpush1.msra.mxu0 0.0
  %1668 = vmatprep.subr.mxu0 0.0
  %1669 = vmatpush1.msra.mxu0 0.0
  %1670 = vmatprep.subr.mxu0 0.0
  %1671 = vmatpush1.msra.mxu0 0.0
  %1672 = vmatprep.subr.mxu0 0.0
  %1673 = vmatpush1.msra.mxu0 0.0
  %1674 = vmatprep.subr.mxu0 0.0
  %1675 = vmatpush1.msra.mxu0 0.0
  %1676 = vmatprep.subr.mxu0 0.0
  %1677 = vmatpush1.msra.mxu0 0.0
  %1678 = vmatprep.subr.mxu0 0.0
  %1679 = vmatpush1.msra.mxu0 0.0
  %1680 = vmatprep.subr.mxu0 0.0
  %1681 = vmatpush1.msra.mxu0 0.0
  %1682 = vmatprep.subr.mxu0 0.0
  %1683 = vmatpush1.msra.mxu0 0.0
  %1684 = vmatprep.subr.mxu0 0.0
  %1685 = vmatpush1.msra.mxu0 0.0
  %1686 = vmatprep.subr.mxu0 0.0
  %1687 = vmatpush1.msra.mxu0 0.0
  %1688 = vmatprep.subr.mxu0 0.0
  %1689 = vmatpush1.msra.mxu0 0.0
  %1690 = vmatprep.subr.mxu0 0.0
  %1691 = vmatpush1.msra.mxu0 0.0
  %1692 = vmatprep.subr.mxu0 0.0
  %1693 = vmatpush1.msra.mxu0 0.0
  %1694 = vmatprep.subr.mxu0 0.0
  %1695 = vmatpush1.msra.mxu0 0.0
  %1696 = vmatprep.subr.mxu0 0.0
  %1697 = vmatpush1.msra.mxu0 0.0
  %1698 = vmatprep.subr.mxu0 0.0
  %1699 = vmatpush1.msra.mxu0 0.0
  %1700 = vmatprep.subr.mxu0 0.0
  %1701 = vmatpush1.msra.mxu0 0.0
  %1702 = vmatprep.subr.mxu0 0.0
  %1703 = vmatpush1.msra.mxu0 0.0
  %1704 = vmatprep.subr.mxu0 0.0
  %1705 = vmatpush1.msra.mxu0 0.0
  %1706 = vmatprep.subr.mxu0 0.0
  %1707 = vmatpush1.msra.mxu0 0.0
  %1708 = vmatprep.subr.mxu0 0.0
  %1709 = vmatpush1.msra.mxu0 0.0
  %1710 = vmatprep.subr.mxu0 0.0
  %1711 = vmatpush1.msra.mxu0 0.0
  %1712 = vmatprep.subr.mxu0 0.0
  %1713 = vmatpush1.msra.mxu0 0.0
  %1714 = vmatprep.subr.mxu0 0.0
  %1715 = vmatpush1.msra.mxu0 0.0
  %1716 = vmatprep.subr.mxu0 0.0
  %1717 = vmatpush1.msra.mxu0 0.0
  %1718 = vmatprep.subr.mxu0 0.0
  %1719 = vmatpush1.msra.mxu0 0.0
  %1720 = vmatprep.mubr.f32.mxu0 0.0
  %1721 = vmatmul.mubr.f32.gmra.mrb[0].mxu0 %v1654
  %v1722 = vpop.f32.mrb[0].mxu0
  %v1723 = vadd.f32 0.0, %v1722
  %v1724 = vpop.f32.mrb[0].mxu0
  %1725 = vdwg.mxu0
  %1727 = vrot.lane.b32.xlu0 %v1650, 32
  %v1728 = vpop.permute.xlu0 %1727
  %v1729 = vsel %vm201, %v1728, 0
  %1731 = vmatprep.subr.mxu0 0.0
  %1732 = vmatpush1.msra.mxu0 %v192
  %1733 = vmatprep.subr.mxu0 0.0
  %1734 = vmatpush1.msra.mxu0 %v193
  %1735 = vmatprep.subr.mxu0 0.0
  %1736 = vmatpush1.msra.mxu0 %v194
  %1737 = vmatprep.subr.mxu0 0.0
  %1738 = vmatpush1.msra.mxu0 %v195
  %1739 = vmatprep.subr.mxu0 0.0
  %1740 = vmatpush1.msra.mxu0 0.0
  %1741 = vmatprep.subr.mxu0 0.0
  %1742 = vmatpush1.msra.mxu0 0.0
  %1743 = vmatprep.subr.mxu0 0.0
  %1744 = vmatpush1.msra.mxu0 0.0
  %1745 = vmatprep.subr.mxu0 0.0
  %1746 = vmatpush1.msra.mxu0 0.0
  %1747 = vmatprep.subr.mxu0 0.0
  %1748 = vmatpush1.msra.mxu0 0.0
  %1749 = vmatprep.subr.mxu0 0.0
  %1750 = vmatpush1.msra.mxu0 0.0
  %1751 = vmatprep.subr.mxu0 0.0
  %1752 = vmatpush1.msra.mxu0 0.0
  %1753 = vmatprep.subr.mxu0 0.0
  %1754 = vmatpush1.msra.mxu0 0.0
  %1755 = vmatprep.subr.mxu0 0.0
  %1756 = vmatpush1.msra.mxu0 0.0
  %1757 = vmatprep.subr.mxu0 0.0
  %1758 = vmatpush1.msra.mxu0 0.0
  %1759 = vmatprep.subr.mxu0 0.0
  %1760 = vmatpush1.msra.mxu0 0.0
  %1761 = vmatprep.subr.mxu0 0.0
  %1762 = vmatpush1.msra.mxu0 0.0
  %1763 = vmatprep.subr.mxu0 0.0
  %1764 = vmatpush1.msra.mxu0 0.0
  %1765 = vmatprep.subr.mxu0 0.0
  %1766 = vmatpush1.msra.mxu0 0.0
  %1767 = vmatprep.subr.mxu0 0.0
  %1768 = vmatpush1.msra.mxu0 0.0
  %1769 = vmatprep.subr.mxu0 0.0
  %1770 = vmatpush1.msra.mxu0 0.0
  %1771 = vmatprep.subr.mxu0 0.0
  %1772 = vmatpush1.msra.mxu0 0.0
  %1773 = vmatprep.subr.mxu0 0.0
  %1774 = vmatpush1.msra.mxu0 0.0
  %1775 = vmatprep.subr.mxu0 0.0
  %1776 = vmatpush1.msra.mxu0 0.0
  %1777 = vmatprep.subr.mxu0 0.0
  %1778 = vmatpush1.msra.mxu0 0.0
  %1779 = vmatprep.subr.mxu0 0.0
  %1780 = vmatpush1.msra.mxu0 0.0
  %1781 = vmatprep.subr.mxu0 0.0
  %1782 = vmatpush1.msra.mxu0 0.0
  %1783 = vmatprep.subr.mxu0 0.0
  %1784 = vmatpush1.msra.mxu0 0.0
  %1785 = vmatprep.subr.mxu0 0.0
  %1786 = vmatpush1.msra.mxu0 0.0
  %1787 = vmatprep.subr.mxu0 0.0
  %1788 = vmatpush1.msra.mxu0 0.0
  %1789 = vmatprep.subr.mxu0 0.0
  %1790 = vmatpush1.msra.mxu0 0.0
  %1791 = vmatprep.subr.mxu0 0.0
  %1792 = vmatpush1.msra.mxu0 0.0
  %1793 = vmatprep.subr.mxu0 0.0
  %1794 = vmatpush1.msra.mxu0 0.0
  %1795 = vmatprep.mubr.f32.mxu0 0.0
  %1796 = vmatmul.mubr.f32.gmra.mrb[0].mxu0 %v1729
  %v1797 = vpop.f32.mrb[0].mxu0
  %v1798 = vadd.f32 %v1723, %v1797
  %v1799 = vpop.f32.mrb[0].mxu0
  %1800 = vdwg.mxu0
  %v1801 = vadd.f32 %v1798, %v449
  %v1802 = vxor.u32 %v1801, 2147483648
  %v1803 = vmul.f32 %v1802, 1.442695
  %v1804 = vpow.pop %v1803
  %v1805 = vadd.f32 %v1804, 1.0
  %v1806 = vrcp.pop %v1805
  %v1807 = vmul.f32 1.0, %v1806
  %v1808 = vtanh.pop %v1801
  %v1809 = vmul.f32 %v1807, %v1549
  %1811 = vrot.lane.b32.xlu0 %v1808, 64
  %v1812 = vpop.permute.xlu0 %1811
  %v1814 = vmul.f32 %v1807, %v1812
  %1816 = vrot.lane.b32.xlu0 %v1814, 32
  %v1817 = vpop.permute.xlu0 %1816
  %v1819 = vadd.f32 %v1809, %v1817
  %v1820 = vtanh.pop %v1819
  %1822 = vrot.lane.b32.xlu0 %v1820, 64
  %v1823 = vpop.permute.xlu0 %1822
  %v1825 = vmul.f32 %v1807, %v1823
  %1826 = vmatprep.subr.mxu0 0.0
  %1827 = vmatpush1.msra.mxu0 %v188
  %1828 = vmatprep.subr.mxu0 0.0
  %1829 = vmatpush1.msra.mxu0 %v189
  %1830 = vmatprep.subr.mxu0 0.0
  %1831 = vmatpush1.msra.mxu0 %v190
  %1832 = vmatprep.subr.mxu0 0.0
  %1833 = vmatpush1.msra.mxu0 %v191
  %1834 = vmatprep.subr.mxu0 0.0
  %1835 = vmatpush1.msra.mxu0 0.0
  %1836 = vmatprep.subr.mxu0 0.0
  %1837 = vmatpush1.msra.mxu0 0.0
  %1838 = vmatprep.subr.mxu0 0.0
  %1839 = vmatpush1.msra.mxu0 0.0
  %1840 = vmatprep.subr.mxu0 0.0
  %1841 = vmatpush1.msra.mxu0 0.0
  %1842 = vmatprep.subr.mxu0 0.0
  %1843 = vmatpush1.msra.mxu0 0.0
  %1844 = vmatprep.subr.mxu0 0.0
  %1845 = vmatpush1.msra.mxu0 0.0
  %1846 = vmatprep.subr.mxu0 0.0
  %1847 = vmatpush1.msra.mxu0 0.0
  %1848 = vmatprep.subr.mxu0 0.0
  %1849 = vmatpush1.msra.mxu0 0.0
  %1850 = vmatprep.subr.mxu0 0.0
  %1851 = vmatpush1.msra.mxu0 0.0
  %1852 = vmatprep.subr.mxu0 0.0
  %1853 = vmatpush1.msra.mxu0 0.0
  %1854 = vmatprep.subr.mxu0 0.0
  %1855 = vmatpush1.msra.mxu0 0.0
  %1856 = vmatprep.subr.mxu0 0.0
  %1857 = vmatpush1.msra.mxu0 0.0
  %1858 = vmatprep.subr.mxu0 0.0
  %1859 = vmatpush1.msra.mxu0 0.0
  %1860 = vmatprep.subr.mxu0 0.0
  %1861 = vmatpush1.msra.mxu0 0.0
  %1862 = vmatprep.subr.mxu0 0.0
  %1863 = vmatpush1.msra.mxu0 0.0
  %1864 = vmatprep.subr.mxu0 0.0
  %1865 = vmatpush1.msra.mxu0 0.0
  %1866 = vmatprep.subr.mxu0 0.0
  %1867 = vmatpush1.msra.mxu0 0.0
  %1868 = vmatprep.subr.mxu0 0.0
  %1869 = vmatpush1.msra.mxu0 0.0
  %1870 = vmatprep.subr.mxu0 0.0
  %1871 = vmatpush1.msra.mxu0 0.0
  %1872 = vmatprep.subr.mxu0 0.0
  %1873 = vmatpush1.msra.mxu0 0.0
  %1874 = vmatprep.subr.mxu0 0.0
  %1875 = vmatpush1.msra.mxu0 0.0
  %1876 = vmatprep.subr.mxu0 0.0
  %1877 = vmatpush1.msra.mxu0 0.0
  %1878 = vmatprep.subr.mxu0 0.0
  %1879 = vmatpush1.msra.mxu0 0.0
  %1880 = vmatprep.subr.mxu0 0.0
  %1881 = vmatpush1.msra.mxu0 0.0
  %1882 = vmatprep.subr.mxu0 0.0
  %1883 = vmatpush1.msra.mxu0 0.0
  %1884 = vmatprep.subr.mxu0 0.0
  %1885 = vmatpush1.msra.mxu0 0.0
  %1886 = vmatprep.subr.mxu0 0.0
  %1887 = vmatpush1.msra.mxu0 0.0
  %1888 = vmatprep.subr.mxu0 0.0
  %1889 = vmatpush1.msra.mxu0 0.0
  %1890 = vmatprep.mubr.f32.mxu0 0.0
  %1891 = vmatmul.mubr.f32.gmra.mrb[0].mxu0 %v1729
  %v1892 = vpop.f32.mrb[0].mxu0
  %v1893 = vadd.f32 0.0, %v1892
  %v1894 = vpop.f32.mrb[0].mxu0
  %1895 = vdwg.mxu0
  %v1896 = vadd.f32 %v180, %v1893
  %v1897 = vxor.u32 %v1896, 2147483648
  %v1898 = vmul.f32 %v1897, 1.442695
  %v1899 = vpow.pop %v1898
  %v1900 = vadd.f32 %v1899, 1.0
  %v1901 = vrcp.pop %v1900
  %v1902 = vmul.f32 1.0, %v1901
  %v1903 = vtanh.pop %v1896
  %v1904 = vmul.f32 %v1902, %v1644
  %1906 = vrot.lane.b32.xlu0 %v1903, 64
  %v1907 = vpop.permute.xlu0 %1906
  %v1909 = vmul.f32 %v1902, %v1907
  %1911 = vrot.lane.b32.xlu0 %v1909, 32
  %v1912 = vpop.permute.xlu0 %1911
  %v1914 = vadd.f32 %v1904, %v1912
  %v1915 = vtanh.pop %v1914
  %1917 = vrot.lane.b32.xlu0 %v1915, 64
  %v1918 = vpop.permute.xlu0 %1917
  %v1920 = vmul.f32 %v1902, %v1918
  %1922 = vrot.lane.b32.xlu0 %v1825, 32
  %v1923 = vpop.permute.xlu0 %1922
  %v1924 = vsel %vm201, %v1923, 0
  %1926 = vmatprep.subr.mxu0 0.0
  %1927 = vmatpush1.msra.mxu0 %v196
  %1928 = vmatprep.subr.mxu0 0.0
  %1929 = vmatpush1.msra.mxu0 %v197
  %1930 = vmatprep.subr.mxu0 0.0
  %1931 = vmatpush1.msra.mxu0 %v198
  %1932 = vmatprep.subr.mxu0 0.0
  %1933 = vmatpush1.msra.mxu0 %v199
  %1934 = vmatprep.subr.mxu0 0.0
  %1935 = vmatpush1.msra.mxu0 0.0
  %1936 = vmatprep.subr.mxu0 0.0
  %1937 = vmatpush1.msra.mxu0 0.0
  %1938 = vmatprep.subr.mxu0 0.0
  %1939 = vmatpush1.msra.mxu0 0.0
  %1940 = vmatprep.subr.mxu0 0.0
  %1941 = vmatpush1.msra.mxu0 0.0
  %1942 = vmatprep.subr.mxu0 0.0
  %1943 = vmatpush1.msra.mxu0 0.0
  %1944 = vmatprep.subr.mxu0 0.0
  %1945 = vmatpush1.msra.mxu0 0.0
  %1946 = vmatprep.subr.mxu0 0.0
  %1947 = vmatpush1.msra.mxu0 0.0
  %1948 = vmatprep.subr.mxu0 0.0
  %1949 = vmatpush1.msra.mxu0 0.0
  %1950 = vmatprep.subr.mxu0 0.0
  %1951 = vmatpush1.msra.mxu0 0.0
  %1952 = vmatprep.subr.mxu0 0.0
  %1953 = vmatpush1.msra.mxu0 0.0
  %1954 = vmatprep.subr.mxu0 0.0
  %1955 = vmatpush1.msra.mxu0 0.0
  %1956 = vmatprep.subr.mxu0 0.0
  %1957 = vmatpush1.msra.mxu0 0.0
  %1958 = vmatprep.subr.mxu0 0.0
  %1959 = vmatpush1.msra.mxu0 0.0
  %1960 = vmatprep.subr.mxu0 0.0
  %1961 = vmatpush1.msra.mxu0 0.0
  %1962 = vmatprep.subr.mxu0 0.0
  %1963 = vmatpush1.msra.mxu0 0.0
  %1964 = vmatprep.subr.mxu0 0.0
  %1965 = vmatpush1.msra.mxu0 0.0
  %1966 = vmatprep.subr.mxu0 0.0
  %1967 = vmatpush1.msra.mxu0 0.0
  %1968 = vmatprep.subr.mxu0 0.0
  %1969 = vmatpush1.msra.mxu0 0.0
  %1970 = vmatprep.subr.mxu0 0.0
  %1971 = vmatpush1.msra.mxu0 0.0
  %1972 = vmatprep.subr.mxu0 0.0
  %1973 = vmatpush1.msra.mxu0 0.0
  %1974 = vmatprep.subr.mxu0 0.0
  %1975 = vmatpush1.msra.mxu0 0.0
  %1976 = vmatprep.subr.mxu0 0.0
  %1977 = vmatpush1.msra.mxu0 0.0
  %1978 = vmatprep.subr.mxu0 0.0
  %1979 = vmatpush1.msra.mxu0 0.0
  %1980 = vmatprep.subr.mxu0 0.0
  %1981 = vmatpush1.msra.mxu0 0.0
  %1982 = vmatprep.subr.mxu0 0.0
  %1983 = vmatpush1.msra.mxu0 0.0
  %1984 = vmatprep.subr.mxu0 0.0
  %1985 = vmatpush1.msra.mxu0 0.0
  %1986 = vmatprep.subr.mxu0 0.0
  %1987 = vmatpush1.msra.mxu0 0.0
  %1988 = vmatprep.subr.mxu0 0.0
  %1989 = vmatpush1.msra.mxu0 0.0
  %1990 = vmatprep.mubr.f32.mxu0 0.0
  %1991 = vmatmul.mubr.f32.gmra.mrb[0].mxu0 %v1924
  %v1992 = vpop.f32.mrb[0].mxu0
  %v1993 = vadd.f32 0.0, %v1992
  %v1994 = vpop.f32.mrb[0].mxu0
  %1995 = vdwg.mxu0
  %1997 = vrot.lane.b32.xlu0 %v1920, 32
  %v1998 = vpop.permute.xlu0 %1997
  %v1999 = vsel %vm201, %v1998, 0
  %2001 = vmatprep.subr.mxu0 0.0
  %2002 = vmatpush1.msra.mxu0 %v192
  %2003 = vmatprep.subr.mxu0 0.0
  %2004 = vmatpush1.msra.mxu0 %v193
  %2005 = vmatprep.subr.mxu0 0.0
  %2006 = vmatpush1.msra.mxu0 %v194
  %2007 = vmatprep.subr.mxu0 0.0
  %2008 = vmatpush1.msra.mxu0 %v195
  %2009 = vmatprep.subr.mxu0 0.0
  %2010 = vmatpush1.msra.mxu0 0.0
  %2011 = vmatprep.subr.mxu0 0.0
  %2012 = vmatpush1.msra.mxu0 0.0
  %2013 = vmatprep.subr.mxu0 0.0
  %2014 = vmatpush1.msra.mxu0 0.0
  %2015 = vmatprep.subr.mxu0 0.0
  %2016 = vmatpush1.msra.mxu0 0.0
  %2017 = vmatprep.subr.mxu0 0.0
  %2018 = vmatpush1.msra.mxu0 0.0
  %2019 = vmatprep.subr.mxu0 0.0
  %2020 = vmatpush1.msra.mxu0 0.0
  %2021 = vmatprep.subr.mxu0 0.0
  %2022 = vmatpush1.msra.mxu0 0.0
  %2023 = vmatprep.subr.mxu0 0.0
  %2024 = vmatpush1.msra.mxu0 0.0
  %2025 = vmatprep.subr.mxu0 0.0
  %2026 = vmatpush1.msra.mxu0 0.0
  %2027 = vmatprep.subr.mxu0 0.0
  %2028 = vmatpush1.msra.mxu0 0.0
  %2029 = vmatprep.subr.mxu0 0.0
  %2030 = vmatpush1.msra.mxu0 0.0
  %2031 = vmatprep.subr.mxu0 0.0
  %2032 = vmatpush1.msra.mxu0 0.0
  %2033 = vmatprep.subr.mxu0 0.0
  %2034 = vmatpush1.msra.mxu0 0.0
  %2035 = vmatprep.subr.mxu0 0.0
  %2036 = vmatpush1.msra.mxu0 0.0
  %2037 = vmatprep.subr.mxu0 0.0
  %2038 = vmatpush1.msra.mxu0 0.0
  %2039 = vmatprep.subr.mxu0 0.0
  %2040 = vmatpush1.msra.mxu0 0.0
  %2041 = vmatprep.subr.mxu0 0.0
  %2042 = vmatpush1.msra.mxu0 0.0
  %2043 = vmatprep.subr.mxu0 0.0
  %2044 = vmatpush1.msra.mxu0 0.0
  %2045 = vmatprep.subr.mxu0 0.0
  %2046 = vmatpush1.msra.mxu0 0.0
  %2047 = vmatprep.subr.mxu0 0.0
  %2048 = vmatpush1.msra.mxu0 0.0
  %2049 = vmatprep.subr.mxu0 0.0
  %2050 = vmatpush1.msra.mxu0 0.0
  %2051 = vmatprep.subr.mxu0 0.0
  %2052 = vmatpush1.msra.mxu0 0.0
  %2053 = vmatprep.subr.mxu0 0.0
  %2054 = vmatpush1.msra.mxu0 0.0
  %2055 = vmatprep.subr.mxu0 0.0
  %2056 = vmatpush1.msra.mxu0 0.0
  %2057 = vmatprep.subr.mxu0 0.0
  %2058 = vmatpush1.msra.mxu0 0.0
  %2059 = vmatprep.subr.mxu0 0.0
  %2060 = vmatpush1.msra.mxu0 0.0
  %2061 = vmatprep.subr.mxu0 0.0
  %2062 = vmatpush1.msra.mxu0 0.0
  %2063 = vmatprep.subr.mxu0 0.0
  %2064 = vmatpush1.msra.mxu0 0.0
  %2065 = vmatprep.mubr.f32.mxu0 0.0
  %2066 = vmatmul.mubr.f32.gmra.mrb[0].mxu0 %v1999
  %v2067 = vpop.f32.mrb[0].mxu0
  %v2068 = vadd.f32 %v1993, %v2067
  %v2069 = vpop.f32.mrb[0].mxu0
  %2070 = vdwg.mxu0
  %v2071 = vadd.f32 %v2068, %v449
  %v2072 = vxor.u32 %v2071, 2147483648
  %v2073 = vmul.f32 %v2072, 1.442695
  %v2074 = vpow.pop %v2073
  %v2075 = vadd.f32 %v2074, 1.0
  %v2076 = vrcp.pop %v2075
  %v2077 = vmul.f32 1.0, %v2076
  %v2078 = vtanh.pop %v2071
  %v2079 = vmul.f32 %v2077, %v1819
  %2081 = vrot.lane.b32.xlu0 %v2078, 64
  %v2082 = vpop.permute.xlu0 %2081
  %v2084 = vmul.f32 %v2077, %v2082
  %2086 = vrot.lane.b32.xlu0 %v2084, 32
  %v2087 = vpop.permute.xlu0 %2086
  %v2089 = vadd.f32 %v2079, %v2087
  %v2090 = vtanh.pop %v2089
  %2092 = vrot.lane.b32.xlu0 %v2090, 64
  %v2093 = vpop.permute.xlu0 %2092
  %v2095 = vmul.f32 %v2077, %v2093
  %2096 = vmatprep.subr.mxu0 0.0
  %2097 = vmatpush1.msra.mxu0 %v188
  %2098 = vmatprep.subr.mxu0 0.0
  %2099 = vmatpush1.msra.mxu0 %v189
  %2100 = vmatprep.subr.mxu0 0.0
  %2101 = vmatpush1.msra.mxu0 %v190
  %2102 = vmatprep.subr.mxu0 0.0
  %2103 = vmatpush1.msra.mxu0 %v191
  %2104 = vmatprep.subr.mxu0 0.0
  %2105 = vmatpush1.msra.mxu0 0.0
  %2106 = vmatprep.subr.mxu0 0.0
  %2107 = vmatpush1.msra.mxu0 0.0
  %2108 = vmatprep.subr.mxu0 0.0
  %2109 = vmatpush1.msra.mxu0 0.0
  %2110 = vmatprep.subr.mxu0 0.0
  %2111 = vmatpush1.msra.mxu0 0.0
  %2112 = vmatprep.subr.mxu0 0.0
  %2113 = vmatpush1.msra.mxu0 0.0
  %2114 = vmatprep.subr.mxu0 0.0
  %2115 = vmatpush1.msra.mxu0 0.0
  %2116 = vmatprep.subr.mxu0 0.0
  %2117 = vmatpush1.msra.mxu0 0.0
  %2118 = vmatprep.subr.mxu0 0.0
  %2119 = vmatpush1.msra.mxu0 0.0
  %2120 = vmatprep.subr.mxu0 0.0
  %2121 = vmatpush1.msra.mxu0 0.0
  %2122 = vmatprep.subr.mxu0 0.0
  %2123 = vmatpush1.msra.mxu0 0.0
  %2124 = vmatprep.subr.mxu0 0.0
  %2125 = vmatpush1.msra.mxu0 0.0
  %2126 = vmatprep.subr.mxu0 0.0
  %2127 = vmatpush1.msra.mxu0 0.0
  %2128 = vmatprep.subr.mxu0 0.0
  %2129 = vmatpush1.msra.mxu0 0.0
  %2130 = vmatprep.subr.mxu0 0.0
  %2131 = vmatpush1.msra.mxu0 0.0
  %2132 = vmatprep.subr.mxu0 0.0
  %2133 = vmatpush1.msra.mxu0 0.0
  %2134 = vmatprep.subr.mxu0 0.0
  %2135 = vmatpush1.msra.mxu0 0.0
  %2136 = vmatprep.subr.mxu0 0.0
  %2137 = vmatpush1.msra.mxu0 0.0
  %2138 = vmatprep.subr.mxu0 0.0
  %2139 = vmatpush1.msra.mxu0 0.0
  %2140 = vmatprep.subr.mxu0 0.0
  %2141 = vmatpush1.msra.mxu0 0.0
  %2142 = vmatprep.subr.mxu0 0.0
  %2143 = vmatpush1.msra.mxu0 0.0
  %2144 = vmatprep.subr.mxu0 0.0
  %2145 = vmatpush1.msra.mxu0 0.0
  %2146 = vmatprep.subr.mxu0 0.0
  %2147 = vmatpush1.msra.mxu0 0.0
  %2148 = vmatprep.subr.mxu0 0.0
  %2149 = vmatpush1.msra.mxu0 0.0
  %2150 = vmatprep.subr.mxu0 0.0
  %2151 = vmatpush1.msra.mxu0 0.0
  %2152 = vmatprep.subr.mxu0 0.0
  %2153 = vmatpush1.msra.mxu0 0.0
  %2154 = vmatprep.subr.mxu0 0.0
  %2155 = vmatpush1.msra.mxu0 0.0
  %2156 = vmatprep.subr.mxu0 0.0
  %2157 = vmatpush1.msra.mxu0 0.0
  %2158 = vmatprep.subr.mxu0 0.0
  %2159 = vmatpush1.msra.mxu0 0.0
  %2160 = vmatprep.mubr.f32.mxu0 0.0
  %2161 = vmatmul.mubr.f32.gmra.mrb[0].mxu0 %v1999
  %v2162 = vpop.f32.mrb[0].mxu0
  %v2163 = vadd.f32 0.0, %v2162
  %v2164 = vpop.f32.mrb[0].mxu0
  %2165 = vdwg.mxu0
  %v2166 = vadd.f32 %v185, %v2163
  %v2167 = vxor.u32 %v2166, 2147483648
  %v2168 = vmul.f32 %v2167, 1.442695
  %v2169 = vpow.pop %v2168
  %v2170 = vadd.f32 %v2169, 1.0
  %v2171 = vrcp.pop %v2170
  %v2172 = vmul.f32 1.0, %v2171
  %v2173 = vtanh.pop %v2166
  %v2174 = vmul.f32 %v2172, %v1914
  %2176 = vrot.lane.b32.xlu0 %v2173, 64
  %v2177 = vpop.permute.xlu0 %2176
  %v2179 = vmul.f32 %v2172, %v2177
  %2181 = vrot.lane.b32.xlu0 %v2179, 32
  %v2182 = vpop.permute.xlu0 %2181
  %v2184 = vadd.f32 %v2174, %v2182
  %v2185 = vtanh.pop %v2184
  %2187 = vrot.lane.b32.xlu0 %v2185, 64
  %v2188 = vpop.permute.xlu0 %2187
  %v2190 = vmul.f32 %v2172, %v2188
  %2192 = vrot.lane.b32.xlu0 %v2095, 32
  %v2193 = vpop.permute.xlu0 %2192
  %v2194 = vsel %vm201, %v2193, 0
  %2196 = vmatprep.subr.mxu0 0.0
  %2197 = vmatpush1.msra.mxu0 %v196
  %2198 = vmatprep.subr.mxu0 0.0
  %2199 = vmatpush1.msra.mxu0 %v197
  %2200 = vmatprep.subr.mxu0 0.0
  %2201 = vmatpush1.msra.mxu0 %v198
  %2202 = vmatprep.subr.mxu0 0.0
  %2203 = vmatpush1.msra.mxu0 %v199
  %2204 = vmatprep.subr.mxu0 0.0
  %2205 = vmatpush1.msra.mxu0 0.0
  %2206 = vmatprep.subr.mxu0 0.0
  %2207 = vmatpush1.msra.mxu0 0.0
  %2208 = vmatprep.subr.mxu0 0.0
  %2209 = vmatpush1.msra.mxu0 0.0
  %2210 = vmatprep.subr.mxu0 0.0
  %2211 = vmatpush1.msra.mxu0 0.0
  %2212 = vmatprep.subr.mxu0 0.0
  %2213 = vmatpush1.msra.mxu0 0.0
  %2214 = vmatprep.subr.mxu0 0.0
  %2215 = vmatpush1.msra.mxu0 0.0
  %2216 = vmatprep.subr.mxu0 0.0
  %2217 = vmatpush1.msra.mxu0 0.0
  %2218 = vmatprep.subr.mxu0 0.0
  %2219 = vmatpush1.msra.mxu0 0.0
  %2220 = vmatprep.subr.mxu0 0.0
  %2221 = vmatpush1.msra.mxu0 0.0
  %2222 = vmatprep.subr.mxu0 0.0
  %2223 = vmatpush1.msra.mxu0 0.0
  %2224 = vmatprep.subr.mxu0 0.0
  %2225 = vmatpush1.msra.mxu0 0.0
  %2226 = vmatprep.subr.mxu0 0.0
  %2227 = vmatpush1.msra.mxu0 0.0
  %2228 = vmatprep.subr.mxu0 0.0
  %2229 = vmatpush1.msra.mxu0 0.0
  %2230 = vmatprep.subr.mxu0 0.0
  %2231 = vmatpush1.msra.mxu0 0.0
  %2232 = vmatprep.subr.mxu0 0.0
  %2233 = vmatpush1.msra.mxu0 0.0
  %2234 = vmatprep.subr.mxu0 0.0
  %2235 = vmatpush1.msra.mxu0 0.0
  %2236 = vmatprep.subr.mxu0 0.0
  %2237 = vmatpush1.msra.mxu0 0.0
  %2238 = vmatprep.subr.mxu0 0.0
  %2239 = vmatpush1.msra.mxu0 0.0
  %2240 = vmatprep.subr.mxu0 0.0
  %2241 = vmatpush1.msra.mxu0 0.0
  %2242 = vmatprep.subr.mxu0 0.0
  %2243 = vmatpush1.msra.mxu0 0.0
  %2244 = vmatprep.subr.mxu0 0.0
  %2245 = vmatpush1.msra.mxu0 0.0
  %2246 = vmatprep.subr.mxu0 0.0
  %2247 = vmatpush1.msra.mxu0 0.0
  %2248 = vmatprep.subr.mxu0 0.0
  %2249 = vmatpush1.msra.mxu0 0.0
  %2250 = vmatprep.subr.mxu0 0.0
  %2251 = vmatpush1.msra.mxu0 0.0
  %2252 = vmatprep.subr.mxu0 0.0
  %2253 = vmatpush1.msra.mxu0 0.0
  %2254 = vmatprep.subr.mxu0 0.0
  %2255 = vmatpush1.msra.mxu0 0.0
  %2256 = vmatprep.subr.mxu0 0.0
  %2257 = vmatpush1.msra.mxu0 0.0
  %2258 = vmatprep.subr.mxu0 0.0
  %2259 = vmatpush1.msra.mxu0 0.0
  %2260 = vmatprep.mubr.f32.mxu0 0.0
  %2261 = vmatmul.mubr.f32.gmra.mrb[0].mxu0 %v2194
  %v2262 = vpop.f32.mrb[0].mxu0
  %v2263 = vadd.f32 0.0, %v2262
  %v2264 = vpop.f32.mrb[0].mxu0
  %2265 = vdwg.mxu0
  %2267 = vrot.lane.b32.xlu0 %v2190, 32
  %v2268 = vpop.permute.xlu0 %2267
  %v2269 = vsel %vm201, %v2268, 0
  %2271 = vmatprep.subr.mxu0 0.0
  %2272 = vmatpush1.msra.mxu0 %v192
  %2273 = vmatprep.subr.mxu0 0.0
  %2274 = vmatpush1.msra.mxu0 %v193
  %2275 = vmatprep.subr.mxu0 0.0
  %2276 = vmatpush1.msra.mxu0 %v194
  %2277 = vmatprep.subr.mxu0 0.0
  %2278 = vmatpush1.msra.mxu0 %v195
  %2279 = vmatprep.subr.mxu0 0.0
  %2280 = vmatpush1.msra.mxu0 0.0
  %2281 = vmatprep.subr.mxu0 0.0
  %2282 = vmatpush1.msra.mxu0 0.0
  %2283 = vmatprep.subr.mxu0 0.0
  %2284 = vmatpush1.msra.mxu0 0.0
  %2285 = vmatprep.subr.mxu0 0.0
  %2286 = vmatpush1.msra.mxu0 0.0
  %2287 = vmatprep.subr.mxu0 0.0
  %2288 = vmatpush1.msra.mxu0 0.0
  %2289 = vmatprep.subr.mxu0 0.0
  %2290 = vmatpush1.msra.mxu0 0.0
  %2291 = vmatprep.subr.mxu0 0.0
  %2292 = vmatpush1.msra.mxu0 0.0
  %2293 = vmatprep.subr.mxu0 0.0
  %2294 = vmatpush1.msra.mxu0 0.0
  %2295 = vmatprep.subr.mxu0 0.0
  %2296 = vmatpush1.msra.mxu0 0.0
  %2297 = vmatprep.subr.mxu0 0.0
  %2298 = vmatpush1.msra.mxu0 0.0
  %2299 = vmatprep.subr.mxu0 0.0
  %2300 = vmatpush1.msra.mxu0 0.0
  %2301 = vmatprep.subr.mxu0 0.0
  %2302 = vmatpush1.msra.mxu0 0.0
  %2303 = vmatprep.subr.mxu0 0.0
  %2304 = vmatpush1.msra.mxu0 0.0
  %2305 = vmatprep.subr.mxu0 0.0
  %2306 = vmatpush1.msra.mxu0 0.0
  %2307 = vmatprep.subr.mxu0 0.0
  %2308 = vmatpush1.msra.mxu0 0.0
  %2309 = vmatprep.subr.mxu0 0.0
  %2310 = vmatpush1.msra.mxu0 0.0
  %2311 = vmatprep.subr.mxu0 0.0
  %2312 = vmatpush1.msra.mxu0 0.0
  %2313 = vmatprep.subr.mxu0 0.0
  %2314 = vmatpush1.msra.mxu0 0.0
  %2315 = vmatprep.subr.mxu0 0.0
  %2316 = vmatpush1.msra.mxu0 0.0
  %2317 = vmatprep.subr.mxu0 0.0
  %2318 = vmatpush1.msra.mxu0 0.0
  %2319 = vmatprep.subr.mxu0 0.0
  %2320 = vmatpush1.msra.mxu0 0.0
  %2321 = vmatprep.subr.mxu0 0.0
  %2322 = vmatpush1.msra.mxu0 0.0
  %2323 = vmatprep.subr.mxu0 0.0
  %2324 = vmatpush1.msra.mxu0 0.0
  %2325 = vmatprep.subr.mxu0 0.0
  %2326 = vmatpush1.msra.mxu0 0.0
  %2327 = vmatprep.subr.mxu0 0.0
  %2328 = vmatpush1.msra.mxu0 0.0
  %2329 = vmatprep.subr.mxu0 0.0
  %2330 = vmatpush1.msra.mxu0 0.0
  %2331 = vmatprep.subr.mxu0 0.0
  %2332 = vmatpush1.msra.mxu0 0.0
  %2333 = vmatprep.subr.mxu0 0.0
  %2334 = vmatpush1.msra.mxu0 0.0
  %2335 = vmatprep.mubr.f32.mxu0 0.0
  %2336 = vmatmul.mubr.f32.gmra.mrb[0].mxu0 %v2269
  %v2337 = vpop.f32.mrb[0].mxu0
  %v2338 = vadd.f32 %v2263, %v2337
  %v2339 = vpop.f32.mrb[0].mxu0
  %2340 = vdwg.mxu0
  %v2341 = vadd.f32 %v2338, %v449
  %v2342 = vxor.u32 %v2341, 2147483648
  %v2343 = vmul.f32 %v2342, 1.442695
  %v2344 = vpow.pop %v2343
  %v2345 = vadd.f32 %v2344, 1.0
  %v2346 = vrcp.pop %v2345
  %v2347 = vmul.f32 1.0, %v2346
  %v2348 = vtanh.pop %v2341
  %v2349 = vmul.f32 %v2347, %v2089
  %2351 = vrot.lane.b32.xlu0 %v2348, 64
  %v2352 = vpop.permute.xlu0 %2351
  %v2354 = vmul.f32 %v2347, %v2352
  %2356 = vrot.lane.b32.xlu0 %v2354, 32
  %v2357 = vpop.permute.xlu0 %2356
  %v2359 = vadd.f32 %v2349, %v2357
  %v2360 = vtanh.pop %v2359
  %2362 = vrot.lane.b32.xlu0 %v2360, 64
  %v2363 = vpop.permute.xlu0 %2362
  %v2365 = vmul.f32 %v2347, %v2363
  %v2366 = vld [vmem:[%s8] sm:$0xff]
  %v2367 = vld [vmem:[%s8 + $0x8] sm:$0xff]
  %v2368 = vld [vmem:[%s8 + $0x10] sm:$0xff]
  %v2369 = vld [vmem:[%s8 + $0x18] sm:$0xff]
  %v2370 = vld [vmem:[%s7] sm:$0xff]
  %v2371 = vld [vmem:[%s9] sm:$0xff]
  %v2372 = vld [vmem:[%s9 + $0x8] sm:$0x7f]
  %vm2373 = vcmask 121856
  %v2375 = vsel %vm2373, %v2370, 0
  %vm2377 = vcmask 1046528
  %v2379 = vsel %vm2377, %v2372, 0
  %2381 = vmatprep.subr.mxu0 0.0
  %2382 = vmatpush1.msra.mxu0 %v2371
  %2383 = vmatprep.subr.mxu0 0.0
  %2384 = vmatpush1.msra.mxu0 %v2379
  %2385 = vmatprep.subr.mxu0 0.0
  %2386 = vmatpush1.msra.mxu0 0.0
  %2387 = vmatprep.subr.mxu0 0.0
  %2388 = vmatpush1.msra.mxu0 0.0
  %2389 = vmatprep.subr.mxu0 0.0
  %2390 = vmatpush1.msra.mxu0 0.0
  %2391 = vmatprep.subr.mxu0 0.0
  %2392 = vmatpush1.msra.mxu0 0.0
  %2393 = vmatprep.subr.mxu0 0.0
  %2394 = vmatpush1.msra.mxu0 0.0
  %2395 = vmatprep.subr.mxu0 0.0
  %2396 = vmatpush1.msra.mxu0 0.0
  %2397 = vmatprep.subr.mxu0 0.0
  %2398 = vmatpush1.msra.mxu0 0.0
  %2399 = vmatprep.subr.mxu0 0.0
  %2400 = vmatpush1.msra.mxu0 0.0
  %2401 = vmatprep.subr.mxu0 0.0
  %2402 = vmatpush1.msra.mxu0 0.0
  %2403 = vmatprep.subr.mxu0 0.0
  %2404 = vmatpush1.msra.mxu0 0.0
  %2405 = vmatprep.subr.mxu0 0.0
  %2406 = vmatpush1.msra.mxu0 0.0
  %2407 = vmatprep.subr.mxu0 0.0
  %2408 = vmatpush1.msra.mxu0 0.0
  %2409 = vmatprep.subr.mxu0 0.0
  %2410 = vmatpush1.msra.mxu0 0.0
  %2411 = vmatprep.subr.mxu0 0.0
  %2412 = vmatpush1.msra.mxu0 0.0
  %2413 = vmatprep.subr.mxu0 0.0
  %2414 = vmatpush1.msra.mxu0 0.0
  %2415 = vmatprep.subr.mxu0 0.0
  %2416 = vmatpush1.msra.mxu0 0.0
  %2417 = vmatprep.subr.mxu0 0.0
  %2418 = vmatpush1.msra.mxu0 0.0
  %2419 = vmatprep.subr.mxu0 0.0
  %2420 = vmatpush1.msra.mxu0 0.0
  %2421 = vmatprep.subr.mxu0 0.0
  %2422 = vmatpush1.msra.mxu0 0.0
  %2423 = vmatprep.subr.mxu0 0.0
  %2424 = vmatpush1.msra.mxu0 0.0
  %2425 = vmatprep.subr.mxu0 0.0
  %2426 = vmatpush1.msra.mxu0 0.0
  %2427 = vmatprep.subr.mxu0 0.0
  %2428 = vmatpush1.msra.mxu0 0.0
  %2429 = vmatprep.subr.mxu0 0.0
  %2430 = vmatpush1.msra.mxu0 0.0
  %2431 = vmatprep.subr.mxu0 0.0
  %2432 = vmatpush1.msra.mxu0 0.0
  %2433 = vmatprep.subr.mxu0 0.0
  %2434 = vmatpush1.msra.mxu0 0.0
  %2435 = vmatprep.subr.mxu0 0.0
  %2436 = vmatpush1.msra.mxu0 0.0
  %2437 = vmatprep.subr.mxu0 0.0
  %2438 = vmatpush1.msra.mxu0 0.0
  %2439 = vmatprep.subr.mxu0 0.0
  %2440 = vmatpush1.msra.mxu0 0.0
  %2441 = vmatprep.subr.mxu0 0.0
  %2442 = vmatpush1.msra.mxu0 0.0
  %2443 = vmatprep.subr.mxu0 0.0
  %2444 = vmatpush1.msra.mxu0 0.0
  %2445 = vmatprep.mubr.f32.mxu0 0.0
  %2446 = vmatmul.mubr.f32.gmra.mrb[0].mxu0 %v2375
  %v2447 = vpop.f32.mrb[0].mxu0
  %v2448 = vadd.f32 0.0, %v2447
  %v2449 = vpop.f32.mrb[0].mxu0
  %2450 = vdwg.mxu0
  %2452 = vrot.lane.b32.xlu0 %v2365, 32
  %v2453 = vpop.permute.xlu0 %2452
  %v2454 = vsel %vm201, %v2453, 0
  %2456 = vmatprep.subr.mxu0 0.0
  %2457 = vmatpush1.msra.mxu0 %v2366
  %2458 = vmatprep.subr.mxu0 0.0
  %2459 = vmatpush1.msra.mxu0 %v2367
  %2460 = vmatprep.subr.mxu0 0.0
  %2461 = vmatpush1.msra.mxu0 %v2368
  %2462 = vmatprep.subr.mxu0 0.0
  %2463 = vmatpush1.msra.mxu0 %v2369
  %2464 = vmatprep.subr.mxu0 0.0
  %2465 = vmatpush1.msra.mxu0 0.0
  %2466 = vmatprep.subr.mxu0 0.0
  %2467 = vmatpush1.msra.mxu0 0.0
  %2468 = vmatprep.subr.mxu0 0.0
  %2469 = vmatpush1.msra.mxu0 0.0
  %2470 = vmatprep.subr.mxu0 0.0
  %2471 = vmatpush1.msra.mxu0 0.0
  %2472 = vmatprep.subr.mxu0 0.0
  %2473 = vmatpush1.msra.mxu0 0.0
  %2474 = vmatprep.subr.mxu0 0.0
  %2475 = vmatpush1.msra.mxu0 0.0
  %2476 = vmatprep.subr.mxu0 0.0
  %2477 = vmatpush1.msra.mxu0 0.0
  %2478 = vmatprep.subr.mxu0 0.0
  %2479 = vmatpush1.msra.mxu0 0.0
  %2480 = vmatprep.subr.mxu0 0.0
  %2481 = vmatpush1.msra.mxu0 0.0
  %2482 = vmatprep.subr.mxu0 0.0
  %2483 = vmatpush1.msra.mxu0 0.0
  %2484 = vmatprep.subr.mxu0 0.0
  %2485 = vmatpush1.msra.mxu0 0.0
  %2486 = vmatprep.subr.mxu0 0.0
  %2487 = vmatpush1.msra.mxu0 0.0
  %2488 = vmatprep.subr.mxu0 0.0
  %2489 = vmatpush1.msra.mxu0 0.0
  %2490 = vmatprep.subr.mxu0 0.0
  %2491 = vmatpush1.msra.mxu0 0.0
  %2492 = vmatprep.subr.mxu0 0.0
  %2493 = vmatpush1.msra.mxu0 0.0
  %2494 = vmatprep.subr.mxu0 0.0
  %2495 = vmatpush1.msra.mxu0 0.0
  %2496 = vmatprep.subr.mxu0 0.0
  %2497 = vmatpush1.msra.mxu0 0.0
  %2498 = vmatprep.subr.mxu0 0.0
  %2499 = vmatpush1.msra.mxu0 0.0
  %2500 = vmatprep.subr.mxu0 0.0
  %2501 = vmatpush1.msra.mxu0 0.0
  %2502 = vmatprep.subr.mxu0 0.0
  %2503 = vmatpush1.msra.mxu0 0.0
  %2504 = vmatprep.subr.mxu0 0.0
  %2505 = vmatpush1.msra.mxu0 0.0
  %2506 = vmatprep.subr.mxu0 0.0
  %2507 = vmatpush1.msra.mxu0 0.0
  %2508 = vmatprep.subr.mxu0 0.0
  %2509 = vmatpush1.msra.mxu0 0.0
  %2510 = vmatprep.subr.mxu0 0.0
  %2511 = vmatpush1.msra.mxu0 0.0
  %2512 = vmatprep.subr.mxu0 0.0
  %2513 = vmatpush1.msra.mxu0 0.0
  %2514 = vmatprep.subr.mxu0 0.0
  %2515 = vmatpush1.msra.mxu0 0.0
  %2516 = vmatprep.subr.mxu0 0.0
  %2517 = vmatpush1.msra.mxu0 0.0
  %2518 = vmatprep.subr.mxu0 0.0
  %2519 = vmatpush1.msra.mxu0 0.0
  %2520 = vmatprep.mubr.f32.mxu0 0.0
  %2521 = vmatmul.mubr.f32.gmra.mrb[0].mxu0 %v2454
  %v2522 = vpop.f32.mrb[0].mxu0
  %v2523 = vadd.f32 %v2448, %v2522
  %v2524 = vpop.f32.mrb[0].mxu0
  %2525 = vdwg.mxu0
  %v2526 = vld [vmem:[%s10] sm:$0x1]
  %v2528 = vlaneseq
  %v2529 = vshrl.u32 %v2528, 7
  %v2530 = vsub.s32 0, %v2529
  %v2531 = vrot.slane %v2526, %v2530
  %v2533 = vadd.f32 %v2523, %v2531
  %vm2534 = vcmask 64512
  %2535 = vst.msk [vmem:[%s11] sm:$0xff] %vm2534, %v2533
  // Predicated region
  $region46: #{lstm_network_forward.1} parent=0 // pred_check
    _
  $region47: #{lstm_network_forward.1} parent=0 // pred_check_branch
    %2537 = sbr.rel (0) target = $region49
  $region48: #{lstm_network_forward.1} parent=0 // pred_region
    _
  $region49: #{lstm_network_forward.1} parent=0 // pred_fallthru
    _
  // Predicated region
  $region50: #{lstm_network_forward.1} parent=0 // pred_check
    _
  $region51: #{lstm_network_forward.1} parent=0 // pred_check_branch
    %2539 = sbr.rel (0) target = $region53
  $region52: #{lstm_network_forward.1} parent=0 // pred_region
    _
  $region53: #{lstm_network_forward.1} parent=0 // pred_fallthru
    _

</llo_original>
